<compile_context>
chip_gen: v6e
topology: v6e:2x2x1
jax: 0.10.0
libtpu: 0.0.40
codegen_flags: <defaults>
</compile_context>

<pallas_src>
import functools

import jax
import jax.numpy as jnp
from jax.experimental import pallas as pl
from jax.experimental.pallas import tpu as pltpu


def _round_up(x, m):
    return ((x + m - 1) // m) * m


# ---------------------------------------------------------------------------
# forward: per-edge gathered inner product + sigmoid
# grid = (edge_tiles [parallel], node_chunks [arbitrary, reduction])
# ---------------------------------------------------------------------------
def _edge_decode_kernel(src_ref, dst_ref, z_ref, o_ref, gs_ref, gd_ref,
                        *, sigmoid):
    c = pl.program_id(1)

    @pl.when(c == 0)
    def _():
        gs_ref[...] = jnp.zeros_like(gs_ref)
        gd_ref[...] = jnp.zeros_like(gd_ref)

    te = src_ref.shape[0]
    nc = z_ref.shape[0]
    z = z_ref[...]                       # (NC, D); bf16 stays bf16 (native MXU)
    src = src_ref[...]                   # (TE, 1) int32 (sublane-oriented for
    dst = dst_ref[...]                   #  the one-hot broadcast below)

    # One-hot gather of this z chunk's rows via MXU matmuls (entries are 0/1,
    # f32 accumulation -> exact).  Intermediates are bounded at (TE, NC).
    node_ids = jax.lax.broadcasted_iota(jnp.int32, (te, nc), 1) + c * nc
    oh_src = (node_ids == src).astype(z.dtype)                   # (TE, NC)
    oh_dst = (node_ids == dst).astype(z.dtype)                   # (TE, NC)
    gs_ref[...] += jnp.dot(oh_src, z, preferred_element_type=jnp.float32)
    gd_ref[...] += jnp.dot(oh_dst, z, preferred_element_type=jnp.float32)

    @pl.when(c == pl.num_programs(1) - 1)
    def _():
        prod = gs_ref[...] * gd_ref[...]                         # (TE, D) f32
        # D-reduction as (1,D) @ (TE,D)^T -> lane-dense (1, TE) row
        # (TE*D MACs: negligible; keeps the output store unmasked/full-lane).
        ones = jnp.ones((1, prod.shape[1]), jnp.float32)
        val = jax.lax.dot_general(ones, prod, (((1,), (1,)), ((), ())),
                                  preferred_element_type=jnp.float32)
        if sigmoid:
            val = jax.nn.sigmoid(val)
        o_ref[...] = val.astype(o_ref.dtype)


def inner_product_decode(z, edge_index, sigmoid=True, edge_tile=256,
                         node_chunk=512):
    """Equivalent of InnerProductDecoder.forward."""
    N, D = z.shape
    E = edge_index.shape[1]
    te = edge_tile
    e_pad = _round_up(max(E, 1), te)
    nb_e = e_pad // te

    nc = min(node_chunk, _round_up(N, 8))
    n_pad = _round_up(N, nc)
    nb_c = n_pad // nc
    z_p = jnp.pad(z, ((0, n_pad - N), (0, 0))) if n_pad != N else z

    src = jnp.pad(edge_index[0].astype(jnp.int32), (0, e_pad - E)).reshape(e_pad, 1)
    dst = jnp.pad(edge_index[1].astype(jnp.int32), (0, e_pad - E)).reshape(e_pad, 1)

    kernel = functools.partial(_edge_decode_kernel, sigmoid=sigmoid)
    out = pl.pallas_call(
        kernel,
        grid_spec=pltpu.PrefetchScalarGridSpec(
            num_scalar_prefetch=0,
            grid=(nb_e, nb_c),
            in_specs=[
                pl.BlockSpec((te, 1), lambda i, c: (i, 0)),      # src ids
                pl.BlockSpec((te, 1), lambda i, c: (i, 0)),      # dst ids
                pl.BlockSpec((nc, D), lambda i, c: (c, 0)),      # z chunk
            ],
            out_specs=pl.BlockSpec((1, te), lambda i, c: (i, 0)),
            scratch_shapes=[pltpu.VMEM((te, D), jnp.float32),    # gathered src rows
                            pltpu.VMEM((te, D), jnp.float32)],   # gathered dst rows
        ),
        out_shape=jax.ShapeDtypeStruct((nb_e, te), z.dtype),
        compiler_params=pltpu.CompilerParams(
            dimension_semantics=("parallel", "arbitrary"),
            vmem_limit_bytes=32 * 1024 * 1024),
    )(src, dst, z_p)
    return out.reshape(-1)[:E]


# ---------------------------------------------------------------------------
# forward_all: dense adjacency sigmoid(z @ z.T), tiled over (i, j) blocks
# ---------------------------------------------------------------------------
def _dense_decode_kernel(zi_ref, zj_ref, o_ref, *, sigmoid):
    # Contract dim 1 of both operands (zi @ zj.T) in the operands' native
    # dtype; f32 accumulation via preferred_element_type.
    acc = jax.lax.dot_general(
        zi_ref[...], zj_ref[...],
        (((1,), (1,)), ((), ())),
        preferred_element_type=jnp.float32)
    if sigmoid:
        acc = jax.nn.sigmoid(acc)
    o_ref[...] = acc.astype(o_ref.dtype)


def inner_product_decode_all(z, sigmoid=True, tile=1024):
    """Equivalent of InnerProductDecoder.forward_all."""
    N, D = z.shape
    # 1024x1024 f32 output block = 4 MiB (8 MiB double-buffered): fits the
    # default scoped VMEM on v6e/v7x and the raised 32 MiB limit on v5e.
    t = min(tile, _round_up(N, 8))
    nb = pl.cdiv(N, t)

    kernel = functools.partial(_dense_decode_kernel, sigmoid=sigmoid)
    return pl.pallas_call(
        kernel,
        grid_spec=pl.GridSpec(
            grid=(nb, nb),
            in_specs=[pl.BlockSpec((t, D), lambda i, j: (i, 0)),
                      pl.BlockSpec((t, D), lambda i, j: (j, 0))],
            out_specs=pl.BlockSpec((t, t), lambda i, j: (i, j)),
        ),
        # No row/column padding and no out[:N, :N] copy: ragged edge blocks
        # are masked by Pallas, so the N^2 result is written exactly once.
        out_shape=jax.ShapeDtypeStruct((N, N), z.dtype),
        compiler_params=pltpu.CompilerParams(
            dimension_semantics=("parallel", "parallel"),
            vmem_limit_bytes=32 * 1024 * 1024),
    )(z, z)


# ---------------------------------------------------------------------------
# demo / correctness check
# ---------------------------------------------------------------------------
if __name__ == "__main__":
    key = jax.random.PRNGKey(0)
    kz, ke = jax.random.split(key)

    N, D, E = 16, 32, 8
    z = jax.random.normal(kz, (N, D), dtype=jnp.float32)
    edge_index = jax.random.randint(ke, (2, E), 0, N, dtype=jnp.int32)

    # forward (edge-wise, sigmoid)
    out = jax.block_until_ready(inner_product_decode(z, edge_index, sigmoid=True))
    ref = jax.nn.sigmoid(jnp.sum(z[edge_index[0]] * z[edge_index[1]], axis=1))
    assert out.shape == (E,)
    assert jnp.allclose(out, ref, atol=1e-5, rtol=1e-5), (out, ref)

    # forward (no sigmoid)
    out_ns = jax.block_until_ready(inner_product_decode(z, edge_index, sigmoid=False))
    ref_ns = jnp.sum(z[edge_index[0]] * z[edge_index[1]], axis=1)
    assert jnp.allclose(out_ns, ref_ns, atol=1e-5, rtol=1e-5), (out_ns, ref_ns)

    # forward_all (dense adjacency)
    adj = jax.block_until_ready(inner_product_decode_all(z, sigmoid=True))
    adj_ref = jax.nn.sigmoid(z @ z.T)
    assert adj.shape == (N, N)
    assert jnp.allclose(adj, adj_ref, atol=1e-5, rtol=1e-5), (adj, adj_ref)

    print("KERNEL_OK")
</pallas_src>

<mosaic_0001>
module attributes {stable_mosaic.version = 11 : i64} {
  func.func @_edge_decode_kernel(%arg0: i32, %arg1: i32, %arg2: memref<256x1xi32, #tpu.memory_space<vmem>>, %arg3: memref<256x1xi32, #tpu.memory_space<vmem>>, %arg4: memref<16x32xf32, #tpu.memory_space<vmem>>, %arg5: memref<1x256xf32, #tpu.memory_space<vmem>>, %arg6: memref<256x32xf32, #tpu.memory_space<vmem>>, %arg7: memref<256x32xf32, #tpu.memory_space<vmem>>) attributes {dimension_semantics = [#tpu.dimension_semantics<parallel>, #tpu.dimension_semantics<arbitrary>], iteration_bounds = array<i64: 1, 1>, scalar_prefetch = 0 : i64, scratch_operands = 2 : i64, tpu.core_type = #tpu.core_type<tc>, window_params = [{transform_indices = @transform_0, window_bounds = array<i64: 256, 1>}, {transform_indices = @transform_1, window_bounds = array<i64: 256, 1>}, {transform_indices = @transform_2, window_bounds = array<i64: 16, 32>}, {transform_indices = @transform_3, window_bounds = array<i64: 1, 256>}]} {
    %c0_i32 = arith.constant 0 : i32
    %0 = arith.cmpi eq, %arg1, %c0_i32 : i32
    %1 = arith.extui %0 : i1 to i32
    %c0_i32_0 = arith.constant 0 : i32
    %2 = arith.cmpi ne, %1, %c0_i32_0 : i32
    scf.if %2 {
      %cst_17 = arith.constant 0.000000e+00 : f32
      %29 = vector.broadcast %cst_17 : f32 to vector<256x32xf32>
      %c0_18 = arith.constant 0 : index
      %c0_19 = arith.constant 0 : index
      %30 = vector.load %arg6[%c0_18, %c0_19] : memref<256x32xf32, #tpu.memory_space<vmem>>, vector<256x32xf32>
      tpu.vector_store %arg6[%c0_18, %c0_19], %29 {strides = array<i32>} : memref<256x32xf32, #tpu.memory_space<vmem>>, vector<256x32xf32>,
      %cst_20 = arith.constant 0.000000e+00 : f32
      %31 = vector.broadcast %cst_20 : f32 to vector<256x32xf32>
      %c0_21 = arith.constant 0 : index
      %c0_22 = arith.constant 0 : index
      %32 = vector.load %arg7[%c0_21, %c0_22] : memref<256x32xf32, #tpu.memory_space<vmem>>, vector<256x32xf32>
      tpu.vector_store %arg7[%c0_21, %c0_22], %31 {strides = array<i32>} : memref<256x32xf32, #tpu.memory_space<vmem>>, vector<256x32xf32>,
    } else {
    }
    %c0 = arith.constant 0 : index
    %c0_1 = arith.constant 0 : index
    %3 = vector.load %arg4[%c0, %c0_1] : memref<16x32xf32, #tpu.memory_space<vmem>>, vector<16x32xf32>
    %c0_2 = arith.constant 0 : index
    %c0_3 = arith.constant 0 : index
    %4 = vector.load %arg2[%c0_2, %c0_3] : memref<256x1xi32, #tpu.memory_space<vmem>>, vector<256x1xi32>
    %c0_4 = arith.constant 0 : index
    %c0_5 = arith.constant 0 : index
    %5 = vector.load %arg3[%c0_4, %c0_5] : memref<256x1xi32, #tpu.memory_space<vmem>>, vector<256x1xi32>
    %6 = tpu.iota {dimensions = array<i32: 1>} : vector<256x16xi32>
    %c16_i32 = arith.constant 16 : i32
    %7 = arith.muli %arg1, %c16_i32 : i32
    %8 = vector.broadcast %7 : i32 to vector<256x16xi32>
    %9 = arith.addi %6, %8 : vector<256x16xi32>
    %10 = vector.broadcast %4 : vector<256x1xi32> to vector<256x16xi32>
    %11 = arith.cmpi eq, %9, %10 : vector<256x16xi32>
    %12 = arith.extui %11 : vector<256x16xi1> to vector<256x16xi32>
    %13 = arith.sitofp %12 : vector<256x16xi32> to vector<256x16xf32>
    %14 = vector.broadcast %5 : vector<256x1xi32> to vector<256x16xi32>
    %15 = arith.cmpi eq, %9, %14 : vector<256x16xi32>
    %16 = arith.extui %15 : vector<256x16xi1> to vector<256x16xi32>
    %17 = arith.sitofp %16 : vector<256x16xi32> to vector<256x16xf32>
    %c0_6 = arith.constant 0 : index
    %c0_7 = arith.constant 0 : index
    %18 = vector.load %arg6[%c0_6, %c0_7] : memref<256x32xf32, #tpu.memory_space<vmem>>, vector<256x32xf32>
    %cst = arith.constant dense<0.000000e+00> : vector<256x32xf32>
    %19 = tpu.matmul %13, %3, %cst {dimension_numbers = #tpu.dot_dimension_numbers<[1], [0], [0], [1], [0, 0, 1, 1], [], []>} : vector<256x16xf32>, vector<16x32xf32>, vector<256x32xf32> -> vector<256x32xf32>
    %20 = arith.addf %18, %19 : vector<256x32xf32>
    %c0_8 = arith.constant 0 : index
    %c0_9 = arith.constant 0 : index
    %21 = vector.load %arg6[%c0_8, %c0_9] : memref<256x32xf32, #tpu.memory_space<vmem>>, vector<256x32xf32>
    tpu.vector_store %arg6[%c0_8, %c0_9], %20 {strides = array<i32>} : memref<256x32xf32, #tpu.memory_space<vmem>>, vector<256x32xf32>,
    %c0_10 = arith.constant 0 : index
    %c0_11 = arith.constant 0 : index
    %22 = vector.load %arg7[%c0_10, %c0_11] : memref<256x32xf32, #tpu.memory_space<vmem>>, vector<256x32xf32>
    %cst_12 = arith.constant dense<0.000000e+00> : vector<256x32xf32>
    %23 = tpu.matmul %17, %3, %cst_12 {dimension_numbers = #tpu.dot_dimension_numbers<[1], [0], [0], [1], [0, 0, 1, 1], [], []>} : vector<256x16xf32>, vector<16x32xf32>, vector<256x32xf32> -> vector<256x32xf32>
    %24 = arith.addf %22, %23 : vector<256x32xf32>
    %c0_13 = arith.constant 0 : index
    %c0_14 = arith.constant 0 : index
    %25 = vector.load %arg7[%c0_13, %c0_14] : memref<256x32xf32, #tpu.memory_space<vmem>>, vector<256x32xf32>
    tpu.vector_store %arg7[%c0_13, %c0_14], %24 {strides = array<i32>} : memref<256x32xf32, #tpu.memory_space<vmem>>, vector<256x32xf32>,
    %c0_i32_15 = arith.constant 0 : i32
    %26 = arith.cmpi eq, %arg1, %c0_i32_15 : i32
    %27 = arith.extui %26 : i1 to i32
    %c0_i32_16 = arith.constant 0 : i32
    %28 = arith.cmpi ne, %27, %c0_i32_16 : i32
    scf.if %28 {
      %c0_17 = arith.constant 0 : index
      %c0_18 = arith.constant 0 : index
      %29 = vector.load %arg6[%c0_17, %c0_18] : memref<256x32xf32, #tpu.memory_space<vmem>>, vector<256x32xf32>
      %c0_19 = arith.constant 0 : index
      %c0_20 = arith.constant 0 : index
      %30 = vector.load %arg7[%c0_19, %c0_20] : memref<256x32xf32, #tpu.memory_space<vmem>>, vector<256x32xf32>
      %31 = arith.mulf %29, %30 : vector<256x32xf32>
      %cst_21 = arith.constant 1.000000e+00 : f32
      %32 = vector.broadcast %cst_21 : f32 to vector<1x32xf32>
      %cst_22 = arith.constant dense<0.000000e+00> : vector<1x256xf32>
      %33 = tpu.matmul %32, %31, %cst_22 {dimension_numbers = #tpu.dot_dimension_numbers<[1], [1], [0], [0], [0, 0, 1, 0], [], []>} : vector<1x32xf32>, vector<256x32xf32>, vector<1x256xf32> -> vector<1x256xf32>
      %34 = arith.negf %33 : vector<1x256xf32>
      %35 = math.exp %34 : vector<1x256xf32>
      %cst_23 = arith.constant 1.000000e+00 : f32
      %36 = vector.broadcast %cst_23 : f32 to vector<1x256xf32>
      %37 = arith.addf %36, %35 : vector<1x256xf32>
      %38 = arith.divf %36, %37 : vector<1x256xf32>
      %c0_24 = arith.constant 0 : index
      %c0_25 = arith.constant 0 : index
      %39 = vector.load %arg5[%c0_24, %c0_25] : memref<1x256xf32, #tpu.memory_space<vmem>>, vector<1x256xf32>
      tpu.vector_store %arg5[%c0_24, %c0_25], %38 {strides = array<i32>} : memref<1x256xf32, #tpu.memory_space<vmem>>, vector<1x256xf32>,
    } else {
    }
    return
  }
  func.func @transform_0(%arg0: i32, %arg1: i32) -> (i32, i32) {
    %c0_i32 = arith.constant 0 : i32
    %c0_i32_0 = arith.constant 0 : i32
    return %arg0, %c0_i32 : i32, i32
  }
  func.func @transform_1(%arg0: i32, %arg1: i32) -> (i32, i32) {
    %c0_i32 = arith.constant 0 : i32
    %c0_i32_0 = arith.constant 0 : i32
    return %arg0, %c0_i32 : i32, i32
  }
  func.func @transform_2(%arg0: i32, %arg1: i32) -> (i32, i32) {
    %c0_i32 = arith.constant 0 : i32
    %c0_i32_0 = arith.constant 0 : i32
    return %arg1, %c0_i32 : i32, i32
  }
  func.func @transform_3(%arg0: i32, %arg1: i32) -> (i32, i32) {
    %c0_i32 = arith.constant 0 : i32
    %c0_i32_0 = arith.constant 0 : i32
    return %arg0, %c0_i32 : i32, i32
  }
}

</mosaic_0001>

<llo_original>
// kernel: tpu_custom_call.1
$region0: #{tpu_custom_call.1}
  #allocation0 [shape = 'u32[]', space=smem, size = 0x4, offset = 0x4, fixed_abs, tag = 'smem constant byte address 0x4 - core index']
  #allocation1 [shape = 'u32[144,128]{1,0:T(1,128)}', space=vmem, size = 0x12000, scoped, tag = 'internal scratch']
  #allocation2 [shape = 'f32[256,32]{1,0:T(8,128)}', space=vmem, size = 0x20000, scoped, tag = 'scratch operand']
  #allocation3 [shape = 'f32[256,32]{1,0:T(8,128)}', space=vmem, size = 0x20000, scoped, tag = 'scratch operand']
  %s0 = inlined_call_operand.vmem [shape: s32[256,1], index: 0, kind: input, shape index: {}]
  %s1 = inlined_call_operand.vmem [shape: s32[256,1], index: 1, kind: input, shape index: {}]
  %s2 = inlined_call_operand.vmem [shape: f32[16,32], index: 2, kind: input, shape index: {}]
  %s3 = inlined_call_operand.hbm [shape: f32[1,256], index: 3, kind: output, shape index: {}]
  %s4 = sld [smem:[#allocation0]]
  $region30: #{tpu_custom_call.1} parent=0
    _
  %s6 = ssub.s32 1, %s4
  %s7 = scalar_select 0, %s6, %s4
  $region1: #{tpu_custom_call.1} parent=0
    #allocation4 [shape = 'u8[1024]{0}', space=vmem, size = 0x400, scoped, tag = 'output window, operand 0, single buffered']
    #allocation5 [shape = 's32[1]{0}', space=sflag, size = 0x4, scoped, tag = 'scoped memory for tpu_custom_call.1']
    %8 = vsyncpa [#allocation5], 0
    // Predicated region
    $region2: #{tpu_custom_call.1} parent=1 // pred_check
      _
    $region3: #{tpu_custom_call.1} parent=1 // pred_check_branch
      %10 = sbr.rel (0) target = $region5
    $region4: #{tpu_custom_call.1} parent=1 // pred_region
      _
    $region5: #{tpu_custom_call.1} parent=1 // pred_fallthru
      _
    // Predicated region
    $region6: #{tpu_custom_call.1} parent=1 // pred_check
      _
    $region7: #{tpu_custom_call.1} parent=1 // pred_check_branch
      %12 = sbr.rel (0) target = $region9
    $region8: #{tpu_custom_call.1} parent=1 // pred_region
      _
    $region9: #{tpu_custom_call.1} parent=1 // pred_fallthru
      _
    // Predicated region
    $region10: #{tpu_custom_call.1} parent=1 // pred_check
      _
    $region11: #{tpu_custom_call.1} parent=1 // pred_check_branch
      %14 = sbr.rel (0) target = $region13
    $region12: #{tpu_custom_call.1} parent=1 // pred_region
      _
    $region13: #{tpu_custom_call.1} parent=1 // pred_fallthru
      _
    %p15 = scmp.eq.s32.totalorder 0, 0
    // Predicated region
    $region14: #{tpu_custom_call.1} parent=1 // pred_check
      %p16 = pneg %p15
    $region15: #{tpu_custom_call.1} parent=1 // pred_check_branch
      %18 = sbr.rel (%p16) target = $region17
    $region16: #{tpu_custom_call.1} parent=1 // pred_region
      %vm19 = vcmask 261120
      %20 = vst.msk [vmem:[#allocation2] sm:$0xff] %vm19, 0.0
      %21 = vst.msk [vmem:[#allocation2 + $0x8] sm:$0xff] %vm19, 0.0
      %22 = vst.msk [vmem:[#allocation2 + $0x10] sm:$0xff] %vm19, 0.0
      %23 = vst.msk [vmem:[#allocation2 + $0x18] sm:$0xff] %vm19, 0.0
      %24 = vst.msk [vmem:[#allocation2 + $0x20] sm:$0xff] %vm19, 0.0
      %25 = vst.msk [vmem:[#allocation2 + $0x28] sm:$0xff] %vm19, 0.0
      %26 = vst.msk [vmem:[#allocation2 + $0x30] sm:$0xff] %vm19, 0.0
      %27 = vst.msk [vmem:[#allocation2 + $0x38] sm:$0xff] %vm19, 0.0
      %28 = vst.msk [vmem:[#allocation2 + $0x40] sm:$0xff] %vm19, 0.0
      %29 = vst.msk [vmem:[#allocation2 + $0x48] sm:$0xff] %vm19, 0.0
      %30 = vst.msk [vmem:[#allocation2 + $0x50] sm:$0xff] %vm19, 0.0
      %31 = vst.msk [vmem:[#allocation2 + $0x58] sm:$0xff] %vm19, 0.0
      %32 = vst.msk [vmem:[#allocation2 + $0x60] sm:$0xff] %vm19, 0.0
      %33 = vst.msk [vmem:[#allocation2 + $0x68] sm:$0xff] %vm19, 0.0
      %34 = vst.msk [vmem:[#allocation2 + $0x70] sm:$0xff] %vm19, 0.0
      %35 = vst.msk [vmem:[#allocation2 + $0x78] sm:$0xff] %vm19, 0.0
      %36 = vst.msk [vmem:[#allocation2 + $0x80] sm:$0xff] %vm19, 0.0
      %37 = vst.msk [vmem:[#allocation2 + $0x88] sm:$0xff] %vm19, 0.0
      %38 = vst.msk [vmem:[#allocation2 + $0x90] sm:$0xff] %vm19, 0.0
      %39 = vst.msk [vmem:[#allocation2 + $0x98] sm:$0xff] %vm19, 0.0
      %40 = vst.msk [vmem:[#allocation2 + $0xa0] sm:$0xff] %vm19, 0.0
      %41 = vst.msk [vmem:[#allocation2 + $0xa8] sm:$0xff] %vm19, 0.0
      %42 = vst.msk [vmem:[#allocation2 + $0xb0] sm:$0xff] %vm19, 0.0
      %43 = vst.msk [vmem:[#allocation2 + $0xb8] sm:$0xff] %vm19, 0.0
      %44 = vst.msk [vmem:[#allocation2 + $0xc0] sm:$0xff] %vm19, 0.0
      %45 = vst.msk [vmem:[#allocation2 + $0xc8] sm:$0xff] %vm19, 0.0
      %46 = vst.msk [vmem:[#allocation2 + $0xd0] sm:$0xff] %vm19, 0.0
      %47 = vst.msk [vmem:[#allocation2 + $0xd8] sm:$0xff] %vm19, 0.0
      %48 = vst.msk [vmem:[#allocation2 + $0xe0] sm:$0xff] %vm19, 0.0
      %49 = vst.msk [vmem:[#allocation2 + $0xe8] sm:$0xff] %vm19, 0.0
      %50 = vst.msk [vmem:[#allocation2 + $0xf0] sm:$0xff] %vm19, 0.0
      %51 = vst.msk [vmem:[#allocation2 + $0xf8] sm:$0xff] %vm19, 0.0
      %52 = vst.msk [vmem:[#allocation3] sm:$0xff] %vm19, 0.0
      %53 = vst.msk [vmem:[#allocation3 + $0x8] sm:$0xff] %vm19, 0.0
      %54 = vst.msk [vmem:[#allocation3 + $0x10] sm:$0xff] %vm19, 0.0
      %55 = vst.msk [vmem:[#allocation3 + $0x18] sm:$0xff] %vm19, 0.0
      %56 = vst.msk [vmem:[#allocation3 + $0x20] sm:$0xff] %vm19, 0.0
      %57 = vst.msk [vmem:[#allocation3 + $0x28] sm:$0xff] %vm19, 0.0
      %58 = vst.msk [vmem:[#allocation3 + $0x30] sm:$0xff] %vm19, 0.0
      %59 = vst.msk [vmem:[#allocation3 + $0x38] sm:$0xff] %vm19, 0.0
      %60 = vst.msk [vmem:[#allocation3 + $0x40] sm:$0xff] %vm19, 0.0
      %61 = vst.msk [vmem:[#allocation3 + $0x48] sm:$0xff] %vm19, 0.0
      %62 = vst.msk [vmem:[#allocation3 + $0x50] sm:$0xff] %vm19, 0.0
      %63 = vst.msk [vmem:[#allocation3 + $0x58] sm:$0xff] %vm19, 0.0
      %64 = vst.msk [vmem:[#allocation3 + $0x60] sm:$0xff] %vm19, 0.0
      %65 = vst.msk [vmem:[#allocation3 + $0x68] sm:$0xff] %vm19, 0.0
      %66 = vst.msk [vmem:[#allocation3 + $0x70] sm:$0xff] %vm19, 0.0
      %67 = vst.msk [vmem:[#allocation3 + $0x78] sm:$0xff] %vm19, 0.0
      %68 = vst.msk [vmem:[#allocation3 + $0x80] sm:$0xff] %vm19, 0.0
      %69 = vst.msk [vmem:[#allocation3 + $0x88] sm:$0xff] %vm19, 0.0
      %70 = vst.msk [vmem:[#allocation3 + $0x90] sm:$0xff] %vm19, 0.0
      %71 = vst.msk [vmem:[#allocation3 + $0x98] sm:$0xff] %vm19, 0.0
      %72 = vst.msk [vmem:[#allocation3 + $0xa0] sm:$0xff] %vm19, 0.0
      %73 = vst.msk [vmem:[#allocation3 + $0xa8] sm:$0xff] %vm19, 0.0
      %74 = vst.msk [vmem:[#allocation3 + $0xb0] sm:$0xff] %vm19, 0.0
      %75 = vst.msk [vmem:[#allocation3 + $0xb8] sm:$0xff] %vm19, 0.0
      %76 = vst.msk [vmem:[#allocation3 + $0xc0] sm:$0xff] %vm19, 0.0
      %77 = vst.msk [vmem:[#allocation3 + $0xc8] sm:$0xff] %vm19, 0.0
      %78 = vst.msk [vmem:[#allocation3 + $0xd0] sm:$0xff] %vm19, 0.0
      %79 = vst.msk [vmem:[#allocation3 + $0xd8] sm:$0xff] %vm19, 0.0
      %80 = vst.msk [vmem:[#allocation3 + $0xe0] sm:$0xff] %vm19, 0.0
      %81 = vst.msk [vmem:[#allocation3 + $0xe8] sm:$0xff] %vm19, 0.0
      %82 = vst.msk [vmem:[#allocation3 + $0xf0] sm:$0xff] %vm19, 0.0
      %83 = vst.msk [vmem:[#allocation3 + $0xf8] sm:$0xff] %vm19, 0.0
    $region17: #{tpu_custom_call.1} parent=1 // pred_fallthru
      _
    %v84 = vld [vmem:[%s2] sm:$0xff]
    %v85 = vld [vmem:[%s2 + $0x8] sm:$0xff]
    %v86 = vld [vmem:[%s0] sm:$0xff]
    %v87 = vld [vmem:[%s0 + $0x8] sm:$0xff]
    %v88 = vld [vmem:[%s0 + $0x10] sm:$0xff]
    %v89 = vld [vmem:[%s0 + $0x18] sm:$0xff]
    %v90 = vld [vmem:[%s0 + $0x20] sm:$0xff]
    %v91 = vld [vmem:[%s0 + $0x28] sm:$0xff]
    %v92 = vld [vmem:[%s0 + $0x30] sm:$0xff]
    %v93 = vld [vmem:[%s0 + $0x38] sm:$0xff]
    %v94 = vld [vmem:[%s0 + $0x40] sm:$0xff]
    %v95 = vld [vmem:[%s0 + $0x48] sm:$0xff]
    %v96 = vld [vmem:[%s0 + $0x50] sm:$0xff]
    %v97 = vld [vmem:[%s0 + $0x58] sm:$0xff]
    %v98 = vld [vmem:[%s0 + $0x60] sm:$0xff]
    %v99 = vld [vmem:[%s0 + $0x68] sm:$0xff]
    %v100 = vld [vmem:[%s0 + $0x70] sm:$0xff]
    %v101 = vld [vmem:[%s0 + $0x78] sm:$0xff]
    %v102 = vld [vmem:[%s0 + $0x80] sm:$0xff]
    %v103 = vld [vmem:[%s0 + $0x88] sm:$0xff]
    %v104 = vld [vmem:[%s0 + $0x90] sm:$0xff]
    %v105 = vld [vmem:[%s0 + $0x98] sm:$0xff]
    %v106 = vld [vmem:[%s0 + $0xa0] sm:$0xff]
    %v107 = vld [vmem:[%s0 + $0xa8] sm:$0xff]
    %v108 = vld [vmem:[%s0 + $0xb0] sm:$0xff]
    %v109 = vld [vmem:[%s0 + $0xb8] sm:$0xff]
    %v110 = vld [vmem:[%s0 + $0xc0] sm:$0xff]
    %v111 = vld [vmem:[%s0 + $0xc8] sm:$0xff]
    %v112 = vld [vmem:[%s0 + $0xd0] sm:$0xff]
    %v113 = vld [vmem:[%s0 + $0xd8] sm:$0xff]
    %v114 = vld [vmem:[%s0 + $0xe0] sm:$0xff]
    %v115 = vld [vmem:[%s0 + $0xe8] sm:$0xff]
    %v116 = vld [vmem:[%s0 + $0xf0] sm:$0xff]
    %v117 = vld [vmem:[%s0 + $0xf8] sm:$0xff]
    %v118 = vld [vmem:[%s1] sm:$0xff]
    %v119 = vld [vmem:[%s1 + $0x8] sm:$0xff]
    %v120 = vld [vmem:[%s1 + $0x10] sm:$0xff]
    %v121 = vld [vmem:[%s1 + $0x18] sm:$0xff]
    %v122 = vld [vmem:[%s1 + $0x20] sm:$0xff]
    %v123 = vld [vmem:[%s1 + $0x28] sm:$0xff]
    %v124 = vld [vmem:[%s1 + $0x30] sm:$0xff]
    %v125 = vld [vmem:[%s1 + $0x38] sm:$0xff]
    %v126 = vld [vmem:[%s1 + $0x40] sm:$0xff]
    %v127 = vld [vmem:[%s1 + $0x48] sm:$0xff]
    %v128 = vld [vmem:[%s1 + $0x50] sm:$0xff]
    %v129 = vld [vmem:[%s1 + $0x58] sm:$0xff]
    %v130 = vld [vmem:[%s1 + $0x60] sm:$0xff]
    %v131 = vld [vmem:[%s1 + $0x68] sm:$0xff]
    %v132 = vld [vmem:[%s1 + $0x70] sm:$0xff]
    %v133 = vld [vmem:[%s1 + $0x78] sm:$0xff]
    %v134 = vld [vmem:[%s1 + $0x80] sm:$0xff]
    %v135 = vld [vmem:[%s1 + $0x88] sm:$0xff]
    %v136 = vld [vmem:[%s1 + $0x90] sm:$0xff]
    %v137 = vld [vmem:[%s1 + $0x98] sm:$0xff]
    %v138 = vld [vmem:[%s1 + $0xa0] sm:$0xff]
    %v139 = vld [vmem:[%s1 + $0xa8] sm:$0xff]
    %v140 = vld [vmem:[%s1 + $0xb0] sm:$0xff]
    %v141 = vld [vmem:[%s1 + $0xb8] sm:$0xff]
    %v142 = vld [vmem:[%s1 + $0xc0] sm:$0xff]
    %v143 = vld [vmem:[%s1 + $0xc8] sm:$0xff]
    %v144 = vld [vmem:[%s1 + $0xd0] sm:$0xff]
    %v145 = vld [vmem:[%s1 + $0xd8] sm:$0xff]
    %v146 = vld [vmem:[%s1 + $0xe0] sm:$0xff]
    %v147 = vld [vmem:[%s1 + $0xe8] sm:$0xff]
    %v148 = vld [vmem:[%s1 + $0xf0] sm:$0xff]
    %v149 = vld [vmem:[%s1 + $0xf8] sm:$0xff]
    %v150 = vlaneseq
    %v151 = vand.u32 %v150, 127
    %s152 = smul.u32 0, 16
    %v153 = vstv %s152
    %v154 = vadd.s32 %v151, %v153
    %155 = vset.pattern.permute.xlu0 0
    %156 = vperm.xlu0 %155, %v86
    %v157 = vpop.permute.xlu0 %156
    %158 = vset.pattern.permute.xlu0 0
    %159 = vperm.xlu0 %158, %v87
    %v160 = vpop.permute.xlu0 %159
    %161 = vset.pattern.permute.xlu0 0
    %162 = vperm.xlu0 %161, %v88
    %v163 = vpop.permute.xlu0 %162
    %164 = vset.pattern.permute.xlu0 0
    %165 = vperm.xlu0 %164, %v89
    %v166 = vpop.permute.xlu0 %165
    %167 = vset.pattern.permute.xlu0 0
    %168 = vperm.xlu0 %167, %v90
    %v169 = vpop.permute.xlu0 %168
    %170 = vset.pattern.permute.xlu0 0
    %171 = vperm.xlu0 %170, %v91
    %v172 = vpop.permute.xlu0 %171
    %173 = vset.pattern.permute.xlu0 0
    %174 = vperm.xlu0 %173, %v92
    %v175 = vpop.permute.xlu0 %174
    %176 = vset.pattern.permute.xlu0 0
    %177 = vperm.xlu0 %176, %v93
    %v178 = vpop.permute.xlu0 %177
    %179 = vset.pattern.permute.xlu0 0
    %180 = vperm.xlu0 %179, %v94
    %v181 = vpop.permute.xlu0 %180
    %182 = vset.pattern.permute.xlu0 0
    %183 = vperm.xlu0 %182, %v95
    %v184 = vpop.permute.xlu0 %183
    %185 = vset.pattern.permute.xlu0 0
    %186 = vperm.xlu0 %185, %v96
    %v187 = vpop.permute.xlu0 %186
    %188 = vset.pattern.permute.xlu0 0
    %189 = vperm.xlu0 %188, %v97
    %v190 = vpop.permute.xlu0 %189
    %191 = vset.pattern.permute.xlu0 0
    %192 = vperm.xlu0 %191, %v98
    %v193 = vpop.permute.xlu0 %192
    %194 = vset.pattern.permute.xlu0 0
    %195 = vperm.xlu0 %194, %v99
    %v196 = vpop.permute.xlu0 %195
    %197 = vset.pattern.permute.xlu0 0
    %198 = vperm.xlu0 %197, %v100
    %v199 = vpop.permute.xlu0 %198
    %200 = vset.pattern.permute.xlu0 0
    %201 = vperm.xlu0 %200, %v101
    %v202 = vpop.permute.xlu0 %201
    %203 = vset.pattern.permute.xlu0 0
    %204 = vperm.xlu0 %203, %v102
    %v205 = vpop.permute.xlu0 %204
    %206 = vset.pattern.permute.xlu0 0
    %207 = vperm.xlu0 %206, %v103
    %v208 = vpop.permute.xlu0 %207
    %209 = vset.pattern.permute.xlu0 0
    %210 = vperm.xlu0 %209, %v104
    %v211 = vpop.permute.xlu0 %210
    %212 = vset.pattern.permute.xlu0 0
    %213 = vperm.xlu0 %212, %v105
    %v214 = vpop.permute.xlu0 %213
    %215 = vset.pattern.permute.xlu0 0
    %216 = vperm.xlu0 %215, %v106
    %v217 = vpop.permute.xlu0 %216
    %218 = vset.pattern.permute.xlu0 0
    %219 = vperm.xlu0 %218, %v107
    %v220 = vpop.permute.xlu0 %219
    %221 = vset.pattern.permute.xlu0 0
    %222 = vperm.xlu0 %221, %v108
    %v223 = vpop.permute.xlu0 %222
    %224 = vset.pattern.permute.xlu0 0
    %225 = vperm.xlu0 %224, %v109
    %v226 = vpop.permute.xlu0 %225
    %227 = vset.pattern.permute.xlu0 0
    %228 = vperm.xlu0 %227, %v110
    %v229 = vpop.permute.xlu0 %228
    %230 = vset.pattern.permute.xlu0 0
    %231 = vperm.xlu0 %230, %v111
    %v232 = vpop.permute.xlu0 %231
    %233 = vset.pattern.permute.xlu0 0
    %234 = vperm.xlu0 %233, %v112
    %v235 = vpop.permute.xlu0 %234
    %236 = vset.pattern.permute.xlu0 0
    %237 = vperm.xlu0 %236, %v113
    %v238 = vpop.permute.xlu0 %237
    %239 = vset.pattern.permute.xlu0 0
    %240 = vperm.xlu0 %239, %v114
    %v241 = vpop.permute.xlu0 %240
    %242 = vset.pattern.permute.xlu0 0
    %243 = vperm.xlu0 %242, %v115
    %v244 = vpop.permute.xlu0 %243
    %245 = vset.pattern.permute.xlu0 0
    %246 = vperm.xlu0 %245, %v116
    %v247 = vpop.permute.xlu0 %246
    %248 = vset.pattern.permute.xlu0 0
    %249 = vperm.xlu0 %248, %v117
    %v250 = vpop.permute.xlu0 %249
    %vm251 = vcmp.eq.s32.totalorder %v154, %v157
    %vm252 = vcmp.eq.s32.totalorder %v154, %v160
    %vm253 = vcmp.eq.s32.totalorder %v154, %v163
    %vm254 = vcmp.eq.s32.totalorder %v154, %v166
    %vm255 = vcmp.eq.s32.totalorder %v154, %v169
    %vm256 = vcmp.eq.s32.totalorder %v154, %v172
    %vm257 = vcmp.eq.s32.totalorder %v154, %v175
    %vm258 = vcmp.eq.s32.totalorder %v154, %v178
    %vm259 = vcmp.eq.s32.totalorder %v154, %v181
    %vm260 = vcmp.eq.s32.totalorder %v154, %v184
    %vm261 = vcmp.eq.s32.totalorder %v154, %v187
    %vm262 = vcmp.eq.s32.totalorder %v154, %v190
    %vm263 = vcmp.eq.s32.totalorder %v154, %v193
    %vm264 = vcmp.eq.s32.totalorder %v154, %v196
    %vm265 = vcmp.eq.s32.totalorder %v154, %v199
    %vm266 = vcmp.eq.s32.totalorder %v154, %v202
    %vm267 = vcmp.eq.s32.totalorder %v154, %v205
    %vm268 = vcmp.eq.s32.totalorder %v154, %v208
    %vm269 = vcmp.eq.s32.totalorder %v154, %v211
    %vm270 = vcmp.eq.s32.totalorder %v154, %v214
    %vm271 = vcmp.eq.s32.totalorder %v154, %v217
    %vm272 = vcmp.eq.s32.totalorder %v154, %v220
    %vm273 = vcmp.eq.s32.totalorder %v154, %v223
    %vm274 = vcmp.eq.s32.totalorder %v154, %v226
    %vm275 = vcmp.eq.s32.totalorder %v154, %v229
    %vm276 = vcmp.eq.s32.totalorder %v154, %v232
    %vm277 = vcmp.eq.s32.totalorder %v154, %v235
    %vm278 = vcmp.eq.s32.totalorder %v154, %v238
    %vm279 = vcmp.eq.s32.totalorder %v154, %v241
    %vm280 = vcmp.eq.s32.totalorder %v154, %v244
    %vm281 = vcmp.eq.s32.totalorder %v154, %v247
    %vm282 = vcmp.eq.s32.totalorder %v154, %v250
    %v283 = vsel %vm251, 1, 0
    %v284 = vsel %vm252, 1, 0
    %v285 = vsel %vm253, 1, 0
    %v286 = vsel %vm254, 1, 0
    %v287 = vsel %vm255, 1, 0
    %v288 = vsel %vm256, 1, 0
    %v289 = vsel %vm257, 1, 0
    %v290 = vsel %vm258, 1, 0
    %v291 = vsel %vm259, 1, 0
    %v292 = vsel %vm260, 1, 0
    %v293 = vsel %vm261, 1, 0
    %v294 = vsel %vm262, 1, 0
    %v295 = vsel %vm263, 1, 0
    %v296 = vsel %vm264, 1, 0
    %v297 = vsel %vm265, 1, 0
    %v298 = vsel %vm266, 1, 0
    %v299 = vsel %vm267, 1, 0
    %v300 = vsel %vm268, 1, 0
    %v301 = vsel %vm269, 1, 0
    %v302 = vsel %vm270, 1, 0
    %v303 = vsel %vm271, 1, 0
    %v304 = vsel %vm272, 1, 0
    %v305 = vsel %vm273, 1, 0
    %v306 = vsel %vm274, 1, 0
    %v307 = vsel %vm275, 1, 0
    %v308 = vsel %vm276, 1, 0
    %v309 = vsel %vm277, 1, 0
    %v310 = vsel %vm278, 1, 0
    %v311 = vsel %vm279, 1, 0
    %v312 = vsel %vm280, 1, 0
    %v313 = vsel %vm281, 1, 0
    %v314 = vsel %vm282, 1, 0
    %v315 = vcvt.s32.f32 %v283
    %v316 = vcvt.s32.f32 %v284
    %v317 = vcvt.s32.f32 %v285
    %v318 = vcvt.s32.f32 %v286
    %v319 = vcvt.s32.f32 %v287
    %v320 = vcvt.s32.f32 %v288
    %v321 = vcvt.s32.f32 %v289
    %v322 = vcvt.s32.f32 %v290
    %v323 = vcvt.s32.f32 %v291
    %v324 = vcvt.s32.f32 %v292
    %v325 = vcvt.s32.f32 %v293
    %v326 = vcvt.s32.f32 %v294
    %v327 = vcvt.s32.f32 %v295
    %v328 = vcvt.s32.f32 %v296
    %v329 = vcvt.s32.f32 %v297
    %v330 = vcvt.s32.f32 %v298
    %v331 = vcvt.s32.f32 %v299
    %v332 = vcvt.s32.f32 %v300
    %v333 = vcvt.s32.f32 %v301
    %v334 = vcvt.s32.f32 %v302
    %v335 = vcvt.s32.f32 %v303
    %v336 = vcvt.s32.f32 %v304
    %v337 = vcvt.s32.f32 %v305
    %v338 = vcvt.s32.f32 %v306
    %v339 = vcvt.s32.f32 %v307
    %v340 = vcvt.s32.f32 %v308
    %v341 = vcvt.s32.f32 %v309
    %v342 = vcvt.s32.f32 %v310
    %v343 = vcvt.s32.f32 %v311
    %v344 = vcvt.s32.f32 %v312
    %v345 = vcvt.s32.f32 %v313
    %v346 = vcvt.s32.f32 %v314
    %347 = vset.pattern.permute.xlu0 0
    %348 = vperm.xlu0 %347, %v118
    %v349 = vpop.permute.xlu0 %348
    %350 = vset.pattern.permute.xlu0 0
    %351 = vperm.xlu0 %350, %v119
    %v352 = vpop.permute.xlu0 %351
    %353 = vset.pattern.permute.xlu0 0
    %354 = vperm.xlu0 %353, %v120
    %v355 = vpop.permute.xlu0 %354
    %356 = vset.pattern.permute.xlu0 0
    %357 = vperm.xlu0 %356, %v121
    %v358 = vpop.permute.xlu0 %357
    %359 = vset.pattern.permute.xlu0 0
    %360 = vperm.xlu0 %359, %v122
    %v361 = vpop.permute.xlu0 %360
    %362 = vset.pattern.permute.xlu0 0
    %363 = vperm.xlu0 %362, %v123
    %v364 = vpop.permute.xlu0 %363
    %365 = vset.pattern.permute.xlu0 0
    %366 = vperm.xlu0 %365, %v124
    %v367 = vpop.permute.xlu0 %366
    %368 = vset.pattern.permute.xlu0 0
    %369 = vperm.xlu0 %368, %v125
    %v370 = vpop.permute.xlu0 %369
    %371 = vset.pattern.permute.xlu0 0
    %372 = vperm.xlu0 %371, %v126
    %v373 = vpop.permute.xlu0 %372
    %374 = vset.pattern.permute.xlu0 0
    %375 = vperm.xlu0 %374, %v127
    %v376 = vpop.permute.xlu0 %375
    %377 = vset.pattern.permute.xlu0 0
    %378 = vperm.xlu0 %377, %v128
    %v379 = vpop.permute.xlu0 %378
    %380 = vset.pattern.permute.xlu0 0
    %381 = vperm.xlu0 %380, %v129
    %v382 = vpop.permute.xlu0 %381
    %383 = vset.pattern.permute.xlu0 0
    %384 = vperm.xlu0 %383, %v130
    %v385 = vpop.permute.xlu0 %384
    %386 = vset.pattern.permute.xlu0 0
    %387 = vperm.xlu0 %386, %v131
    %v388 = vpop.permute.xlu0 %387
    %389 = vset.pattern.permute.xlu0 0
    %390 = vperm.xlu0 %389, %v132
    %v391 = vpop.permute.xlu0 %390
    %392 = vset.pattern.permute.xlu0 0
    %393 = vperm.xlu0 %392, %v133
    %v394 = vpop.permute.xlu0 %393
    %395 = vset.pattern.permute.xlu0 0
    %396 = vperm.xlu0 %395, %v134
    %v397 = vpop.permute.xlu0 %396
    %398 = vset.pattern.permute.xlu0 0
    %399 = vperm.xlu0 %398, %v135
    %v400 = vpop.permute.xlu0 %399
    %401 = vset.pattern.permute.xlu0 0
    %402 = vperm.xlu0 %401, %v136
    %v403 = vpop.permute.xlu0 %402
    %404 = vset.pattern.permute.xlu0 0
    %405 = vperm.xlu0 %404, %v137
    %v406 = vpop.permute.xlu0 %405
    %407 = vset.pattern.permute.xlu0 0
    %408 = vperm.xlu0 %407, %v138
    %v409 = vpop.permute.xlu0 %408
    %410 = vset.pattern.permute.xlu0 0
    %411 = vperm.xlu0 %410, %v139
    %v412 = vpop.permute.xlu0 %411
    %413 = vset.pattern.permute.xlu0 0
    %414 = vperm.xlu0 %413, %v140
    %v415 = vpop.permute.xlu0 %414
    %416 = vset.pattern.permute.xlu0 0
    %417 = vperm.xlu0 %416, %v141
    %v418 = vpop.permute.xlu0 %417
    %419 = vset.pattern.permute.xlu0 0
    %420 = vperm.xlu0 %419, %v142
    %v421 = vpop.permute.xlu0 %420
    %422 = vset.pattern.permute.xlu0 0
    %423 = vperm.xlu0 %422, %v143
    %v424 = vpop.permute.xlu0 %423
    %425 = vset.pattern.permute.xlu0 0
    %426 = vperm.xlu0 %425, %v144
    %v427 = vpop.permute.xlu0 %426
    %428 = vset.pattern.permute.xlu0 0
    %429 = vperm.xlu0 %428, %v145
    %v430 = vpop.permute.xlu0 %429
    %431 = vset.pattern.permute.xlu0 0
    %432 = vperm.xlu0 %431, %v146
    %v433 = vpop.permute.xlu0 %432
    %434 = vset.pattern.permute.xlu0 0
    %435 = vperm.xlu0 %434, %v147
    %v436 = vpop.permute.xlu0 %435
    %437 = vset.pattern.permute.xlu0 0
    %438 = vperm.xlu0 %437, %v148
    %v439 = vpop.permute.xlu0 %438
    %440 = vset.pattern.permute.xlu0 0
    %441 = vperm.xlu0 %440, %v149
    %v442 = vpop.permute.xlu0 %441
    %vm443 = vcmp.eq.s32.totalorder %v154, %v349
    %vm444 = vcmp.eq.s32.totalorder %v154, %v352
    %vm445 = vcmp.eq.s32.totalorder %v154, %v355
    %vm446 = vcmp.eq.s32.totalorder %v154, %v358
    %vm447 = vcmp.eq.s32.totalorder %v154, %v361
    %vm448 = vcmp.eq.s32.totalorder %v154, %v364
    %vm449 = vcmp.eq.s32.totalorder %v154, %v367
    %vm450 = vcmp.eq.s32.totalorder %v154, %v370
    %vm451 = vcmp.eq.s32.totalorder %v154, %v373
    %vm452 = vcmp.eq.s32.totalorder %v154, %v376
    %vm453 = vcmp.eq.s32.totalorder %v154, %v379
    %vm454 = vcmp.eq.s32.totalorder %v154, %v382
    %vm455 = vcmp.eq.s32.totalorder %v154, %v385
    %vm456 = vcmp.eq.s32.totalorder %v154, %v388
    %vm457 = vcmp.eq.s32.totalorder %v154, %v391
    %vm458 = vcmp.eq.s32.totalorder %v154, %v394
    %vm459 = vcmp.eq.s32.totalorder %v154, %v397
    %vm460 = vcmp.eq.s32.totalorder %v154, %v400
    %vm461 = vcmp.eq.s32.totalorder %v154, %v403
    %vm462 = vcmp.eq.s32.totalorder %v154, %v406
    %vm463 = vcmp.eq.s32.totalorder %v154, %v409
    %vm464 = vcmp.eq.s32.totalorder %v154, %v412
    %vm465 = vcmp.eq.s32.totalorder %v154, %v415
    %vm466 = vcmp.eq.s32.totalorder %v154, %v418
    %vm467 = vcmp.eq.s32.totalorder %v154, %v421
    %vm468 = vcmp.eq.s32.totalorder %v154, %v424
    %vm469 = vcmp.eq.s32.totalorder %v154, %v427
    %vm470 = vcmp.eq.s32.totalorder %v154, %v430
    %vm471 = vcmp.eq.s32.totalorder %v154, %v433
    %vm472 = vcmp.eq.s32.totalorder %v154, %v436
    %vm473 = vcmp.eq.s32.totalorder %v154, %v439
    %vm474 = vcmp.eq.s32.totalorder %v154, %v442
    %v475 = vsel %vm443, 1, 0
    %v476 = vsel %vm444, 1, 0
    %v477 = vsel %vm445, 1, 0
    %v478 = vsel %vm446, 1, 0
    %v479 = vsel %vm447, 1, 0
    %v480 = vsel %vm448, 1, 0
    %v481 = vsel %vm449, 1, 0
    %v482 = vsel %vm450, 1, 0
    %v483 = vsel %vm451, 1, 0
    %v484 = vsel %vm452, 1, 0
    %v485 = vsel %vm453, 1, 0
    %v486 = vsel %vm454, 1, 0
    %v487 = vsel %vm455, 1, 0
    %v488 = vsel %vm456, 1, 0
    %v489 = vsel %vm457, 1, 0
    %v490 = vsel %vm458, 1, 0
    %v491 = vsel %vm459, 1, 0
    %v492 = vsel %vm460, 1, 0
    %v493 = vsel %vm461, 1, 0
    %v494 = vsel %vm462, 1, 0
    %v495 = vsel %vm463, 1, 0
    %v496 = vsel %vm464, 1, 0
    %v497 = vsel %vm465, 1, 0
    %v498 = vsel %vm466, 1, 0
    %v499 = vsel %vm467, 1, 0
    %v500 = vsel %vm468, 1, 0
    %v501 = vsel %vm469, 1, 0
    %v502 = vsel %vm470, 1, 0
    %v503 = vsel %vm471, 1, 0
    %v504 = vsel %vm472, 1, 0
    %v505 = vsel %vm473, 1, 0
    %v506 = vsel %vm474, 1, 0
    %v507 = vcvt.s32.f32 %v475
    %v508 = vcvt.s32.f32 %v476
    %v509 = vcvt.s32.f32 %v477
    %v510 = vcvt.s32.f32 %v478
    %v511 = vcvt.s32.f32 %v479
    %v512 = vcvt.s32.f32 %v480
    %v513 = vcvt.s32.f32 %v481
    %v514 = vcvt.s32.f32 %v482
    %v515 = vcvt.s32.f32 %v483
    %v516 = vcvt.s32.f32 %v484
    %v517 = vcvt.s32.f32 %v485
    %v518 = vcvt.s32.f32 %v486
    %v519 = vcvt.s32.f32 %v487
    %v520 = vcvt.s32.f32 %v488
    %v521 = vcvt.s32.f32 %v489
    %v522 = vcvt.s32.f32 %v490
    %v523 = vcvt.s32.f32 %v491
    %v524 = vcvt.s32.f32 %v492
    %v525 = vcvt.s32.f32 %v493
    %v526 = vcvt.s32.f32 %v494
    %v527 = vcvt.s32.f32 %v495
    %v528 = vcvt.s32.f32 %v496
    %v529 = vcvt.s32.f32 %v497
    %v530 = vcvt.s32.f32 %v498
    %v531 = vcvt.s32.f32 %v499
    %v532 = vcvt.s32.f32 %v500
    %v533 = vcvt.s32.f32 %v501
    %v534 = vcvt.s32.f32 %v502
    %v535 = vcvt.s32.f32 %v503
    %v536 = vcvt.s32.f32 %v504
    %v537 = vcvt.s32.f32 %v505
    %v538 = vcvt.s32.f32 %v506
    %v539 = vld [vmem:[#allocation2] sm:$0xff]
    %v540 = vld [vmem:[#allocation2 + $0x8] sm:$0xff]
    %v541 = vld [vmem:[#allocation2 + $0x10] sm:$0xff]
    %v542 = vld [vmem:[#allocation2 + $0x18] sm:$0xff]
    %v543 = vld [vmem:[#allocation2 + $0x20] sm:$0xff]
    %v544 = vld [vmem:[#allocation2 + $0x28] sm:$0xff]
    %v545 = vld [vmem:[#allocation2 + $0x30] sm:$0xff]
    %v546 = vld [vmem:[#allocation2 + $0x38] sm:$0xff]
    %v547 = vld [vmem:[#allocation2 + $0x40] sm:$0xff]
    %v548 = vld [vmem:[#allocation2 + $0x48] sm:$0xff]
    %v549 = vld [vmem:[#allocation2 + $0x50] sm:$0xff]
    %v550 = vld [vmem:[#allocation2 + $0x58] sm:$0xff]
    %v551 = vld [vmem:[#allocation2 + $0x60] sm:$0xff]
    %v552 = vld [vmem:[#allocation2 + $0x68] sm:$0xff]
    %v553 = vld [vmem:[#allocation2 + $0x70] sm:$0xff]
    %v554 = vld [vmem:[#allocation2 + $0x78] sm:$0xff]
    %v555 = vld [vmem:[#allocation2 + $0x80] sm:$0xff]
    %v556 = vld [vmem:[#allocation2 + $0x88] sm:$0xff]
    %v557 = vld [vmem:[#allocation2 + $0x90] sm:$0xff]
    %v558 = vld [vmem:[#allocation2 + $0x98] sm:$0xff]
    %v559 = vld [vmem:[#allocation2 + $0xa0] sm:$0xff]
    %v560 = vld [vmem:[#allocation2 + $0xa8] sm:$0xff]
    %v561 = vld [vmem:[#allocation2 + $0xb0] sm:$0xff]
    %v562 = vld [vmem:[#allocation2 + $0xb8] sm:$0xff]
    %v563 = vld [vmem:[#allocation2 + $0xc0] sm:$0xff]
    %v564 = vld [vmem:[#allocation2 + $0xc8] sm:$0xff]
    %v565 = vld [vmem:[#allocation2 + $0xd0] sm:$0xff]
    %v566 = vld [vmem:[#allocation2 + $0xd8] sm:$0xff]
    %v567 = vld [vmem:[#allocation2 + $0xe0] sm:$0xff]
    %v568 = vld [vmem:[#allocation2 + $0xe8] sm:$0xff]
    %v569 = vld [vmem:[#allocation2 + $0xf0] sm:$0xff]
    %v570 = vld [vmem:[#allocation2 + $0xf8] sm:$0xff]
    %vm571 = vcmask 130048
    %v573 = vsel %vm571, %v315, 0
    %v576 = vsel %vm571, %v316, 0
    %v579 = vsel %vm571, %v317, 0
    %v582 = vsel %vm571, %v318, 0
    %v585 = vsel %vm571, %v319, 0
    %v588 = vsel %vm571, %v320, 0
    %v591 = vsel %vm571, %v321, 0
    %v594 = vsel %vm571, %v322, 0
    %v597 = vsel %vm571, %v323, 0
    %v600 = vsel %vm571, %v324, 0
    %v603 = vsel %vm571, %v325, 0
    %v606 = vsel %vm571, %v326, 0
    %v609 = vsel %vm571, %v327, 0
    %v612 = vsel %vm571, %v328, 0
    %v615 = vsel %vm571, %v329, 0
    %v618 = vsel %vm571, %v330, 0
    %v621 = vsel %vm571, %v331, 0
    %v624 = vsel %vm571, %v332, 0
    %v627 = vsel %vm571, %v333, 0
    %v630 = vsel %vm571, %v334, 0
    %v633 = vsel %vm571, %v335, 0
    %v636 = vsel %vm571, %v336, 0
    %v639 = vsel %vm571, %v337, 0
    %v642 = vsel %vm571, %v338, 0
    %v645 = vsel %vm571, %v339, 0
    %v648 = vsel %vm571, %v340, 0
    %v651 = vsel %vm571, %v341, 0
    %v654 = vsel %vm571, %v342, 0
    %v657 = vsel %vm571, %v343, 0
    %v660 = vsel %vm571, %v344, 0
    %v663 = vsel %vm571, %v345, 0
    %v666 = vsel %vm571, %v346, 0
    %668 = vmatprep.subr.mxu0 0.0
    %669 = vmatpush1.msra.mxu0 0.0
    %670 = vmatprep.subr.mxu0 0.0
    %671 = vmatpush1.msra.mxu0 0.0
    %672 = vmatprep.subr.mxu0 0.0
    %673 = vmatpush1.msra.mxu0 0.0
    %674 = vmatprep.subr.mxu0 0.0
    %675 = vmatpush1.msra.mxu0 0.0
    %676 = vmatprep.subr.mxu0 0.0
    %677 = vmatpush1.msra.mxu0 0.0
    %678 = vmatprep.subr.mxu0 0.0
    %679 = vmatpush1.msra.mxu0 0.0
    %680 = vmatprep.subr.mxu0 0.0
    %681 = vmatpush1.msra.mxu0 0.0
    %682 = vmatprep.subr.mxu0 0.0
    %683 = vmatpush1.msra.mxu0 0.0
    %684 = vmatprep.subr.mxu0 0.0
    %685 = vmatpush1.msra.mxu0 0.0
    %686 = vmatprep.subr.mxu0 0.0
    %687 = vmatpush1.msra.mxu0 0.0
    %688 = vmatprep.subr.mxu0 0.0
    %689 = vmatpush1.msra.mxu0 0.0
    %690 = vmatprep.subr.mxu0 0.0
    %691 = vmatpush1.msra.mxu0 0.0
    %692 = vmatprep.subr.mxu0 0.0
    %693 = vmatpush1.msra.mxu0 0.0
    %694 = vmatprep.subr.mxu0 0.0
    %695 = vmatpush1.msra.mxu0 0.0
    %696 = vmatprep.subr.mxu0 0.0
    %697 = vmatpush1.msra.mxu0 %v85
    %698 = vmatprep.subr.mxu0 0.0
    %699 = vmatpush1.msra.mxu0 %v84
    %700 = vmatprep.subr.mxu0 0.0
    %701 = vmatpush2.msra.mxu0 0.0
    %702 = vmatprep.subr.mxu0 0.0
    %703 = vmatpush2.msra.mxu0 0.0
    %704 = vmatprep.subr.mxu0 0.0
    %705 = vmatpush2.msra.mxu0 0.0
    %706 = vmatprep.subr.mxu0 0.0
    %707 = vmatpush2.msra.mxu0 0.0
    %708 = vmatprep.subr.mxu0 0.0
    %709 = vmatpush2.msra.mxu0 0.0
    %710 = vmatprep.subr.mxu0 0.0
    %711 = vmatpush2.msra.mxu0 0.0
    %712 = vmatprep.subr.mxu0 0.0
    %713 = vmatpush2.msra.mxu0 0.0
    %714 = vmatprep.subr.mxu0 0.0
    %715 = vmatpush2.msra.mxu0 0.0
    %716 = vmatprep.subr.mxu0 0.0
    %717 = vmatpush2.msra.mxu0 0.0
    %718 = vmatprep.subr.mxu0 0.0
    %719 = vmatpush2.msra.mxu0 0.0
    %720 = vmatprep.subr.mxu0 0.0
    %721 = vmatpush2.msra.mxu0 0.0
    %722 = vmatprep.subr.mxu0 0.0
    %723 = vmatpush2.msra.mxu0 0.0
    %724 = vmatprep.subr.mxu0 0.0
    %725 = vmatpush2.msra.mxu0 0.0
    %726 = vmatprep.subr.mxu0 0.0
    %727 = vmatpush2.msra.mxu0 0.0
    %728 = vmatprep.subr.mxu0 0.0
    %729 = vmatpush2.msra.mxu0 0.0
    %730 = vmatprep.subr.mxu0 0.0
    %731 = vmatpush2.msra.mxu0 0.0
    %732 = vmatprep.mubr.f32.mxu0 0.0
    %733 = vmatmul.mubr.f32.gmra.mxu0 %v573
    %v734 = vpop.f32.mrf.mxu0
    %v735 = vadd.f32 0.0, %v734
    %v736 = vpop.f32.mrf.mxu0
    %737 = vmatprep.mubr.f32.mxu0 0.0
    %738 = vmatmul.mubr.f32.gmra.mxu0 %v576
    %v739 = vpop.f32.mrf.mxu0
    %v740 = vadd.f32 0.0, %v739
    %v741 = vpop.f32.mrf.mxu0
    %742 = vmatprep.mubr.f32.mxu0 0.0
    %743 = vmatmul.mubr.f32.gmra.mxu0 %v579
    %v744 = vpop.f32.mrf.mxu0
    %v745 = vadd.f32 0.0, %v744
    %v746 = vpop.f32.mrf.mxu0
    %747 = vmatprep.mubr.f32.mxu0 0.0
    %748 = vmatmul.mubr.f32.gmra.mxu0 %v582
    %v749 = vpop.f32.mrf.mxu0
    %v750 = vadd.f32 0.0, %v749
    %v751 = vpop.f32.mrf.mxu0
    %752 = vmatprep.mubr.f32.mxu0 0.0
    %753 = vmatmul.mubr.f32.gmra.mxu0 %v585
    %v754 = vpop.f32.mrf.mxu0
    %v755 = vadd.f32 0.0, %v754
    %v756 = vpop.f32.mrf.mxu0
    %757 = vmatprep.mubr.f32.mxu0 0.0
    %758 = vmatmul.mubr.f32.gmra.mxu0 %v588
    %v759 = vpop.f32.mrf.mxu0
    %v760 = vadd.f32 0.0, %v759
    %v761 = vpop.f32.mrf.mxu0
    %762 = vmatprep.mubr.f32.mxu0 0.0
    %763 = vmatmul.mubr.f32.gmra.mxu0 %v591
    %v764 = vpop.f32.mrf.mxu0
    %v765 = vadd.f32 0.0, %v764
    %v766 = vpop.f32.mrf.mxu0
    %767 = vmatprep.mubr.f32.mxu0 0.0
    %768 = vmatmul.mubr.f32.gmra.mxu0 %v594
    %v769 = vpop.f32.mrf.mxu0
    %v770 = vadd.f32 0.0, %v769
    %v771 = vpop.f32.mrf.mxu0
    %772 = vmatprep.mubr.f32.mxu0 0.0
    %773 = vmatmul.mubr.f32.gmra.mxu0 %v597
    %v774 = vpop.f32.mrf.mxu0
    %v775 = vadd.f32 0.0, %v774
    %v776 = vpop.f32.mrf.mxu0
    %777 = vmatprep.mubr.f32.mxu0 0.0
    %778 = vmatmul.mubr.f32.gmra.mxu0 %v600
    %v779 = vpop.f32.mrf.mxu0
    %v780 = vadd.f32 0.0, %v779
    %v781 = vpop.f32.mrf.mxu0
    %782 = vmatprep.mubr.f32.mxu0 0.0
    %783 = vmatmul.mubr.f32.gmra.mxu0 %v603
    %v784 = vpop.f32.mrf.mxu0
    %v785 = vadd.f32 0.0, %v784
    %v786 = vpop.f32.mrf.mxu0
    %787 = vmatprep.mubr.f32.mxu0 0.0
    %788 = vmatmul.mubr.f32.gmra.mxu0 %v606
    %v789 = vpop.f32.mrf.mxu0
    %v790 = vadd.f32 0.0, %v789
    %v791 = vpop.f32.mrf.mxu0
    %792 = vmatprep.mubr.f32.mxu0 0.0
    %793 = vmatmul.mubr.f32.gmra.mxu0 %v609
    %v794 = vpop.f32.mrf.mxu0
    %v795 = vadd.f32 0.0, %v794
    %v796 = vpop.f32.mrf.mxu0
    %797 = vmatprep.mubr.f32.mxu0 0.0
    %798 = vmatmul.mubr.f32.gmra.mxu0 %v612
    %v799 = vpop.f32.mrf.mxu0
    %v800 = vadd.f32 0.0, %v799
    %v801 = vpop.f32.mrf.mxu0
    %802 = vmatprep.mubr.f32.mxu0 0.0
    %803 = vmatmul.mubr.f32.gmra.mxu0 %v615
    %v804 = vpop.f32.mrf.mxu0
    %v805 = vadd.f32 0.0, %v804
    %v806 = vpop.f32.mrf.mxu0
    %807 = vmatprep.mubr.f32.mxu0 0.0
    %808 = vmatmul.mubr.f32.gmra.mxu0 %v618
    %v809 = vpop.f32.mrf.mxu0
    %v810 = vadd.f32 0.0, %v809
    %v811 = vpop.f32.mrf.mxu0
    %812 = vmatprep.mubr.f32.mxu0 0.0
    %813 = vmatmul.mubr.f32.gmra.mxu0 %v621
    %v814 = vpop.f32.mrf.mxu0
    %v815 = vadd.f32 0.0, %v814
    %v816 = vpop.f32.mrf.mxu0
    %817 = vmatprep.mubr.f32.mxu0 0.0
    %818 = vmatmul.mubr.f32.gmra.mxu0 %v624
    %v819 = vpop.f32.mrf.mxu0
    %v820 = vadd.f32 0.0, %v819
    %v821 = vpop.f32.mrf.mxu0
    %822 = vmatprep.mubr.f32.mxu0 0.0
    %823 = vmatmul.mubr.f32.gmra.mxu0 %v627
    %v824 = vpop.f32.mrf.mxu0
    %v825 = vadd.f32 0.0, %v824
    %v826 = vpop.f32.mrf.mxu0
    %827 = vmatprep.mubr.f32.mxu0 0.0
    %828 = vmatmul.mubr.f32.gmra.mxu0 %v630
    %v829 = vpop.f32.mrf.mxu0
    %v830 = vadd.f32 0.0, %v829
    %v831 = vpop.f32.mrf.mxu0
    %832 = vmatprep.mubr.f32.mxu0 0.0
    %833 = vmatmul.mubr.f32.gmra.mxu0 %v633
    %v834 = vpop.f32.mrf.mxu0
    %v835 = vadd.f32 0.0, %v834
    %v836 = vpop.f32.mrf.mxu0
    %837 = vmatprep.mubr.f32.mxu0 0.0
    %838 = vmatmul.mubr.f32.gmra.mxu0 %v636
    %v839 = vpop.f32.mrf.mxu0
    %v840 = vadd.f32 0.0, %v839
    %v841 = vpop.f32.mrf.mxu0
    %842 = vmatprep.mubr.f32.mxu0 0.0
    %843 = vmatmul.mubr.f32.gmra.mxu0 %v639
    %v844 = vpop.f32.mrf.mxu0
    %v845 = vadd.f32 0.0, %v844
    %v846 = vpop.f32.mrf.mxu0
    %847 = vmatprep.mubr.f32.mxu0 0.0
    %848 = vmatmul.mubr.f32.gmra.mxu0 %v642
    %v849 = vpop.f32.mrf.mxu0
    %v850 = vadd.f32 0.0, %v849
    %v851 = vpop.f32.mrf.mxu0
    %852 = vmatprep.mubr.f32.mxu0 0.0
    %853 = vmatmul.mubr.f32.gmra.mxu0 %v645
    %v854 = vpop.f32.mrf.mxu0
    %v855 = vadd.f32 0.0, %v854
    %v856 = vpop.f32.mrf.mxu0
    %857 = vmatprep.mubr.f32.mxu0 0.0
    %858 = vmatmul.mubr.f32.gmra.mxu0 %v648
    %v859 = vpop.f32.mrf.mxu0
    %v860 = vadd.f32 0.0, %v859
    %v861 = vpop.f32.mrf.mxu0
    %862 = vmatprep.mubr.f32.mxu0 0.0
    %863 = vmatmul.mubr.f32.gmra.mxu0 %v651
    %v864 = vpop.f32.mrf.mxu0
    %v865 = vadd.f32 0.0, %v864
    %v866 = vpop.f32.mrf.mxu0
    %867 = vmatprep.mubr.f32.mxu0 0.0
    %868 = vmatmul.mubr.f32.gmra.mxu0 %v654
    %v869 = vpop.f32.mrf.mxu0
    %v870 = vadd.f32 0.0, %v869
    %v871 = vpop.f32.mrf.mxu0
    %872 = vmatprep.mubr.f32.mxu0 0.0
    %873 = vmatmul.mubr.f32.gmra.mxu0 %v657
    %v874 = vpop.f32.mrf.mxu0
    %v875 = vadd.f32 0.0, %v874
    %v876 = vpop.f32.mrf.mxu0
    %877 = vmatprep.mubr.f32.mxu0 0.0
    %878 = vmatmul.mubr.f32.gmra.mxu0 %v660
    %v879 = vpop.f32.mrf.mxu0
    %v880 = vadd.f32 0.0, %v879
    %v881 = vpop.f32.mrf.mxu0
    %882 = vmatprep.mubr.f32.mxu0 0.0
    %883 = vmatmul.mubr.f32.gmra.mxu0 %v663
    %v884 = vpop.f32.mrf.mxu0
    %v885 = vadd.f32 0.0, %v884
    %v886 = vpop.f32.mrf.mxu0
    %887 = vmatprep.mubr.f32.mxu0 0.0
    %888 = vmatmul.mubr.f32.gmra.mxu0 %v666
    %v889 = vpop.f32.mrf.mxu0
    %v890 = vadd.f32 0.0, %v889
    %v891 = vpop.f32.mrf.mxu0
    %892 = vdwg.mxu0
    %v893 = vadd.f32 %v539, %v735
    %v894 = vadd.f32 %v540, %v740
    %v895 = vadd.f32 %v541, %v745
    %v896 = vadd.f32 %v542, %v750
    %v897 = vadd.f32 %v543, %v755
    %v898 = vadd.f32 %v544, %v760
    %v899 = vadd.f32 %v545, %v765
    %v900 = vadd.f32 %v546, %v770
    %v901 = vadd.f32 %v547, %v775
    %v902 = vadd.f32 %v548, %v780
    %v903 = vadd.f32 %v549, %v785
    %v904 = vadd.f32 %v550, %v790
    %v905 = vadd.f32 %v551, %v795
    %v906 = vadd.f32 %v552, %v800
    %v907 = vadd.f32 %v553, %v805
    %v908 = vadd.f32 %v554, %v810
    %v909 = vadd.f32 %v555, %v815
    %v910 = vadd.f32 %v556, %v820
    %v911 = vadd.f32 %v557, %v825
    %v912 = vadd.f32 %v558, %v830
    %v913 = vadd.f32 %v559, %v835
    %v914 = vadd.f32 %v560, %v840
    %v915 = vadd.f32 %v561, %v845
    %v916 = vadd.f32 %v562, %v850
    %v917 = vadd.f32 %v563, %v855
    %v918 = vadd.f32 %v564, %v860
    %v919 = vadd.f32 %v565, %v865
    %v920 = vadd.f32 %v566, %v870
    %v921 = vadd.f32 %v567, %v875
    %v922 = vadd.f32 %v568, %v880
    %v923 = vadd.f32 %v569, %v885
    %v924 = vadd.f32 %v570, %v890
    %vm925 = vcmask 261120
    %926 = vst.msk [vmem:[#allocation2] sm:$0xff] %vm925, %v893
    %927 = vst.msk [vmem:[#allocation2 + $0x8] sm:$0xff] %vm925, %v894
    %928 = vst.msk [vmem:[#allocation2 + $0x10] sm:$0xff] %vm925, %v895
    %929 = vst.msk [vmem:[#allocation2 + $0x18] sm:$0xff] %vm925, %v896
    %930 = vst.msk [vmem:[#allocation2 + $0x20] sm:$0xff] %vm925, %v897
    %931 = vst.msk [vmem:[#allocation2 + $0x28] sm:$0xff] %vm925, %v898
    %932 = vst.msk [vmem:[#allocation2 + $0x30] sm:$0xff] %vm925, %v899
    %933 = vst.msk [vmem:[#allocation2 + $0x38] sm:$0xff] %vm925, %v900
    %934 = vst.msk [vmem:[#allocation2 + $0x40] sm:$0xff] %vm925, %v901
    %935 = vst.msk [vmem:[#allocation2 + $0x48] sm:$0xff] %vm925, %v902
    %936 = vst.msk [vmem:[#allocation2 + $0x50] sm:$0xff] %vm925, %v903
    %937 = vst.msk [vmem:[#allocation2 + $0x58] sm:$0xff] %vm925, %v904
    %938 = vst.msk [vmem:[#allocation2 + $0x60] sm:$0xff] %vm925, %v905
    %939 = vst.msk [vmem:[#allocation2 + $0x68] sm:$0xff] %vm925, %v906
    %940 = vst.msk [vmem:[#allocation2 + $0x70] sm:$0xff] %vm925, %v907
    %941 = vst.msk [vmem:[#allocation2 + $0x78] sm:$0xff] %vm925, %v908
    %942 = vst.msk [vmem:[#allocation2 + $0x80] sm:$0xff] %vm925, %v909
    %943 = vst.msk [vmem:[#allocation2 + $0x88] sm:$0xff] %vm925, %v910
    %944 = vst.msk [vmem:[#allocation2 + $0x90] sm:$0xff] %vm925, %v911
    %945 = vst.msk [vmem:[#allocation2 + $0x98] sm:$0xff] %vm925, %v912
    %946 = vst.msk [vmem:[#allocation2 + $0xa0] sm:$0xff] %vm925, %v913
    %947 = vst.msk [vmem:[#allocation2 + $0xa8] sm:$0xff] %vm925, %v914
    %948 = vst.msk [vmem:[#allocation2 + $0xb0] sm:$0xff] %vm925, %v915
    %949 = vst.msk [vmem:[#allocation2 + $0xb8] sm:$0xff] %vm925, %v916
    %950 = vst.msk [vmem:[#allocation2 + $0xc0] sm:$0xff] %vm925, %v917
    %951 = vst.msk [vmem:[#allocation2 + $0xc8] sm:$0xff] %vm925, %v918
    %952 = vst.msk [vmem:[#allocation2 + $0xd0] sm:$0xff] %vm925, %v919
    %953 = vst.msk [vmem:[#allocation2 + $0xd8] sm:$0xff] %vm925, %v920
    %954 = vst.msk [vmem:[#allocation2 + $0xe0] sm:$0xff] %vm925, %v921
    %955 = vst.msk [vmem:[#allocation2 + $0xe8] sm:$0xff] %vm925, %v922
    %956 = vst.msk [vmem:[#allocation2 + $0xf0] sm:$0xff] %vm925, %v923
    %957 = vst.msk [vmem:[#allocation2 + $0xf8] sm:$0xff] %vm925, %v924
    %v958 = vld [vmem:[#allocation3] sm:$0xff]
    %v959 = vld [vmem:[#allocation3 + $0x8] sm:$0xff]
    %v960 = vld [vmem:[#allocation3 + $0x10] sm:$0xff]
    %v961 = vld [vmem:[#allocation3 + $0x18] sm:$0xff]
    %v962 = vld [vmem:[#allocation3 + $0x20] sm:$0xff]
    %v963 = vld [vmem:[#allocation3 + $0x28] sm:$0xff]
    %v964 = vld [vmem:[#allocation3 + $0x30] sm:$0xff]
    %v965 = vld [vmem:[#allocation3 + $0x38] sm:$0xff]
    %v966 = vld [vmem:[#allocation3 + $0x40] sm:$0xff]
    %v967 = vld [vmem:[#allocation3 + $0x48] sm:$0xff]
    %v968 = vld [vmem:[#allocation3 + $0x50] sm:$0xff]
    %v969 = vld [vmem:[#allocation3 + $0x58] sm:$0xff]
    %v970 = vld [vmem:[#allocation3 + $0x60] sm:$0xff]
    %v971 = vld [vmem:[#allocation3 + $0x68] sm:$0xff]
    %v972 = vld [vmem:[#allocation3 + $0x70] sm:$0xff]
    %v973 = vld [vmem:[#allocation3 + $0x78] sm:$0xff]
    %v974 = vld [vmem:[#allocation3 + $0x80] sm:$0xff]
    %v975 = vld [vmem:[#allocation3 + $0x88] sm:$0xff]
    %v976 = vld [vmem:[#allocation3 + $0x90] sm:$0xff]
    %v977 = vld [vmem:[#allocation3 + $0x98] sm:$0xff]
    %v978 = vld [vmem:[#allocation3 + $0xa0] sm:$0xff]
    %v979 = vld [vmem:[#allocation3 + $0xa8] sm:$0xff]
    %v980 = vld [vmem:[#allocation3 + $0xb0] sm:$0xff]
    %v981 = vld [vmem:[#allocation3 + $0xb8] sm:$0xff]
    %v982 = vld [vmem:[#allocation3 + $0xc0] sm:$0xff]
    %v983 = vld [vmem:[#allocation3 + $0xc8] sm:$0xff]
    %v984 = vld [vmem:[#allocation3 + $0xd0] sm:$0xff]
    %v985 = vld [vmem:[#allocation3 + $0xd8] sm:$0xff]
    %v986 = vld [vmem:[#allocation3 + $0xe0] sm:$0xff]
    %v987 = vld [vmem:[#allocation3 + $0xe8] sm:$0xff]
    %v988 = vld [vmem:[#allocation3 + $0xf0] sm:$0xff]
    %v989 = vld [vmem:[#allocation3 + $0xf8] sm:$0xff]
    %v991 = vsel %vm571, %v507, 0
    %v994 = vsel %vm571, %v508, 0
    %v997 = vsel %vm571, %v509, 0
    %v1000 = vsel %vm571, %v510, 0
    %v1003 = vsel %vm571, %v511, 0
    %v1006 = vsel %vm571, %v512, 0
    %v1009 = vsel %vm571, %v513, 0
    %v1012 = vsel %vm571, %v514, 0
    %v1015 = vsel %vm571, %v515, 0
    %v1018 = vsel %vm571, %v516, 0
    %v1021 = vsel %vm571, %v517, 0
    %v1024 = vsel %vm571, %v518, 0
    %v1027 = vsel %vm571, %v519, 0
    %v1030 = vsel %vm571, %v520, 0
    %v1033 = vsel %vm571, %v521, 0
    %v1036 = vsel %vm571, %v522, 0
    %v1039 = vsel %vm571, %v523, 0
    %v1042 = vsel %vm571, %v524, 0
    %v1045 = vsel %vm571, %v525, 0
    %v1048 = vsel %vm571, %v526, 0
    %v1051 = vsel %vm571, %v527, 0
    %v1054 = vsel %vm571, %v528, 0
    %v1057 = vsel %vm571, %v529, 0
    %v1060 = vsel %vm571, %v530, 0
    %v1063 = vsel %vm571, %v531, 0
    %v1066 = vsel %vm571, %v532, 0
    %v1069 = vsel %vm571, %v533, 0
    %v1072 = vsel %vm571, %v534, 0
    %v1075 = vsel %vm571, %v535, 0
    %v1078 = vsel %vm571, %v536, 0
    %v1081 = vsel %vm571, %v537, 0
    %v1084 = vsel %vm571, %v538, 0
    %1086 = vmatprep.subr.mxu0 0.0
    %1087 = vmatpush1.msra.mxu0 0.0
    %1088 = vmatprep.subr.mxu0 0.0
    %1089 = vmatpush1.msra.mxu0 0.0
    %1090 = vmatprep.subr.mxu0 0.0
    %1091 = vmatpush1.msra.mxu0 0.0
    %1092 = vmatprep.subr.mxu0 0.0
    %1093 = vmatpush1.msra.mxu0 0.0
    %1094 = vmatprep.subr.mxu0 0.0
    %1095 = vmatpush1.msra.mxu0 0.0
    %1096 = vmatprep.subr.mxu0 0.0
    %1097 = vmatpush1.msra.mxu0 0.0
    %1098 = vmatprep.subr.mxu0 0.0
    %1099 = vmatpush1.msra.mxu0 0.0
    %1100 = vmatprep.subr.mxu0 0.0
    %1101 = vmatpush1.msra.mxu0 0.0
    %1102 = vmatprep.subr.mxu0 0.0
    %1103 = vmatpush1.msra.mxu0 0.0
    %1104 = vmatprep.subr.mxu0 0.0
    %1105 = vmatpush1.msra.mxu0 0.0
    %1106 = vmatprep.subr.mxu0 0.0
    %1107 = vmatpush1.msra.mxu0 0.0
    %1108 = vmatprep.subr.mxu0 0.0
    %1109 = vmatpush1.msra.mxu0 0.0
    %1110 = vmatprep.subr.mxu0 0.0
    %1111 = vmatpush1.msra.mxu0 0.0
    %1112 = vmatprep.subr.mxu0 0.0
    %1113 = vmatpush1.msra.mxu0 0.0
    %1114 = vmatprep.subr.mxu0 0.0
    %1115 = vmatpush1.msra.mxu0 %v85
    %1116 = vmatprep.subr.mxu0 0.0
    %1117 = vmatpush1.msra.mxu0 %v84
    %1118 = vmatprep.subr.mxu0 0.0
    %1119 = vmatpush2.msra.mxu0 0.0
    %1120 = vmatprep.subr.mxu0 0.0
    %1121 = vmatpush2.msra.mxu0 0.0
    %1122 = vmatprep.subr.mxu0 0.0
    %1123 = vmatpush2.msra.mxu0 0.0
    %1124 = vmatprep.subr.mxu0 0.0
    %1125 = vmatpush2.msra.mxu0 0.0
    %1126 = vmatprep.subr.mxu0 0.0
    %1127 = vmatpush2.msra.mxu0 0.0
    %1128 = vmatprep.subr.mxu0 0.0
    %1129 = vmatpush2.msra.mxu0 0.0
    %1130 = vmatprep.subr.mxu0 0.0
    %1131 = vmatpush2.msra.mxu0 0.0
    %1132 = vmatprep.subr.mxu0 0.0
    %1133 = vmatpush2.msra.mxu0 0.0
    %1134 = vmatprep.subr.mxu0 0.0
    %1135 = vmatpush2.msra.mxu0 0.0
    %1136 = vmatprep.subr.mxu0 0.0
    %1137 = vmatpush2.msra.mxu0 0.0
    %1138 = vmatprep.subr.mxu0 0.0
    %1139 = vmatpush2.msra.mxu0 0.0
    %1140 = vmatprep.subr.mxu0 0.0
    %1141 = vmatpush2.msra.mxu0 0.0
    %1142 = vmatprep.subr.mxu0 0.0
    %1143 = vmatpush2.msra.mxu0 0.0
    %1144 = vmatprep.subr.mxu0 0.0
    %1145 = vmatpush2.msra.mxu0 0.0
    %1146 = vmatprep.subr.mxu0 0.0
    %1147 = vmatpush2.msra.mxu0 0.0
    %1148 = vmatprep.subr.mxu0 0.0
    %1149 = vmatpush2.msra.mxu0 0.0
    %1150 = vmatprep.mubr.f32.mxu0 0.0
    %1151 = vmatmul.mubr.f32.gmra.mxu0 %v991
    %v1152 = vpop.f32.mrf.mxu0
    %v1153 = vadd.f32 0.0, %v1152
    %v1154 = vpop.f32.mrf.mxu0
    %1155 = vmatprep.mubr.f32.mxu0 0.0
    %1156 = vmatmul.mubr.f32.gmra.mxu0 %v994
    %v1157 = vpop.f32.mrf.mxu0
    %v1158 = vadd.f32 0.0, %v1157
    %v1159 = vpop.f32.mrf.mxu0
    %1160 = vmatprep.mubr.f32.mxu0 0.0
    %1161 = vmatmul.mubr.f32.gmra.mxu0 %v997
    %v1162 = vpop.f32.mrf.mxu0
    %v1163 = vadd.f32 0.0, %v1162
    %v1164 = vpop.f32.mrf.mxu0
    %1165 = vmatprep.mubr.f32.mxu0 0.0
    %1166 = vmatmul.mubr.f32.gmra.mxu0 %v1000
    %v1167 = vpop.f32.mrf.mxu0
    %v1168 = vadd.f32 0.0, %v1167
    %v1169 = vpop.f32.mrf.mxu0
    %1170 = vmatprep.mubr.f32.mxu0 0.0
    %1171 = vmatmul.mubr.f32.gmra.mxu0 %v1003
    %v1172 = vpop.f32.mrf.mxu0
    %v1173 = vadd.f32 0.0, %v1172
    %v1174 = vpop.f32.mrf.mxu0
    %1175 = vmatprep.mubr.f32.mxu0 0.0
    %1176 = vmatmul.mubr.f32.gmra.mxu0 %v1006
    %v1177 = vpop.f32.mrf.mxu0
    %v1178 = vadd.f32 0.0, %v1177
    %v1179 = vpop.f32.mrf.mxu0
    %1180 = vmatprep.mubr.f32.mxu0 0.0
    %1181 = vmatmul.mubr.f32.gmra.mxu0 %v1009
    %v1182 = vpop.f32.mrf.mxu0
    %v1183 = vadd.f32 0.0, %v1182
    %v1184 = vpop.f32.mrf.mxu0
    %1185 = vmatprep.mubr.f32.mxu0 0.0
    %1186 = vmatmul.mubr.f32.gmra.mxu0 %v1012
    %v1187 = vpop.f32.mrf.mxu0
    %v1188 = vadd.f32 0.0, %v1187
    %v1189 = vpop.f32.mrf.mxu0
    %1190 = vmatprep.mubr.f32.mxu0 0.0
    %1191 = vmatmul.mubr.f32.gmra.mxu0 %v1015
    %v1192 = vpop.f32.mrf.mxu0
    %v1193 = vadd.f32 0.0, %v1192
    %v1194 = vpop.f32.mrf.mxu0
    %1195 = vmatprep.mubr.f32.mxu0 0.0
    %1196 = vmatmul.mubr.f32.gmra.mxu0 %v1018
    %v1197 = vpop.f32.mrf.mxu0
    %v1198 = vadd.f32 0.0, %v1197
    %v1199 = vpop.f32.mrf.mxu0
    %1200 = vmatprep.mubr.f32.mxu0 0.0
    %1201 = vmatmul.mubr.f32.gmra.mxu0 %v1021
    %v1202 = vpop.f32.mrf.mxu0
    %v1203 = vadd.f32 0.0, %v1202
    %v1204 = vpop.f32.mrf.mxu0
    %1205 = vmatprep.mubr.f32.mxu0 0.0
    %1206 = vmatmul.mubr.f32.gmra.mxu0 %v1024
    %v1207 = vpop.f32.mrf.mxu0
    %v1208 = vadd.f32 0.0, %v1207
    %v1209 = vpop.f32.mrf.mxu0
    %1210 = vmatprep.mubr.f32.mxu0 0.0
    %1211 = vmatmul.mubr.f32.gmra.mxu0 %v1027
    %v1212 = vpop.f32.mrf.mxu0
    %v1213 = vadd.f32 0.0, %v1212
    %v1214 = vpop.f32.mrf.mxu0
    %1215 = vmatprep.mubr.f32.mxu0 0.0
    %1216 = vmatmul.mubr.f32.gmra.mxu0 %v1030
    %v1217 = vpop.f32.mrf.mxu0
    %v1218 = vadd.f32 0.0, %v1217
    %v1219 = vpop.f32.mrf.mxu0
    %1220 = vmatprep.mubr.f32.mxu0 0.0
    %1221 = vmatmul.mubr.f32.gmra.mxu0 %v1033
    %v1222 = vpop.f32.mrf.mxu0
    %v1223 = vadd.f32 0.0, %v1222
    %v1224 = vpop.f32.mrf.mxu0
    %1225 = vmatprep.mubr.f32.mxu0 0.0
    %1226 = vmatmul.mubr.f32.gmra.mxu0 %v1036
    %v1227 = vpop.f32.mrf.mxu0
    %v1228 = vadd.f32 0.0, %v1227
    %v1229 = vpop.f32.mrf.mxu0
    %1230 = vmatprep.mubr.f32.mxu0 0.0
    %1231 = vmatmul.mubr.f32.gmra.mxu0 %v1039
    %v1232 = vpop.f32.mrf.mxu0
    %v1233 = vadd.f32 0.0, %v1232
    %v1234 = vpop.f32.mrf.mxu0
    %1235 = vmatprep.mubr.f32.mxu0 0.0
    %1236 = vmatmul.mubr.f32.gmra.mxu0 %v1042
    %v1237 = vpop.f32.mrf.mxu0
    %v1238 = vadd.f32 0.0, %v1237
    %v1239 = vpop.f32.mrf.mxu0
    %1240 = vmatprep.mubr.f32.mxu0 0.0
    %1241 = vmatmul.mubr.f32.gmra.mxu0 %v1045
    %v1242 = vpop.f32.mrf.mxu0
    %v1243 = vadd.f32 0.0, %v1242
    %v1244 = vpop.f32.mrf.mxu0
    %1245 = vmatprep.mubr.f32.mxu0 0.0
    %1246 = vmatmul.mubr.f32.gmra.mxu0 %v1048
    %v1247 = vpop.f32.mrf.mxu0
    %v1248 = vadd.f32 0.0, %v1247
    %v1249 = vpop.f32.mrf.mxu0
    %1250 = vmatprep.mubr.f32.mxu0 0.0
    %1251 = vmatmul.mubr.f32.gmra.mxu0 %v1051
    %v1252 = vpop.f32.mrf.mxu0
    %v1253 = vadd.f32 0.0, %v1252
    %v1254 = vpop.f32.mrf.mxu0
    %1255 = vmatprep.mubr.f32.mxu0 0.0
    %1256 = vmatmul.mubr.f32.gmra.mxu0 %v1054
    %v1257 = vpop.f32.mrf.mxu0
    %v1258 = vadd.f32 0.0, %v1257
    %v1259 = vpop.f32.mrf.mxu0
    %1260 = vmatprep.mubr.f32.mxu0 0.0
    %1261 = vmatmul.mubr.f32.gmra.mxu0 %v1057
    %v1262 = vpop.f32.mrf.mxu0
    %v1263 = vadd.f32 0.0, %v1262
    %v1264 = vpop.f32.mrf.mxu0
    %1265 = vmatprep.mubr.f32.mxu0 0.0
    %1266 = vmatmul.mubr.f32.gmra.mxu0 %v1060
    %v1267 = vpop.f32.mrf.mxu0
    %v1268 = vadd.f32 0.0, %v1267
    %v1269 = vpop.f32.mrf.mxu0
    %1270 = vmatprep.mubr.f32.mxu0 0.0
    %1271 = vmatmul.mubr.f32.gmra.mxu0 %v1063
    %v1272 = vpop.f32.mrf.mxu0
    %v1273 = vadd.f32 0.0, %v1272
    %v1274 = vpop.f32.mrf.mxu0
    %1275 = vmatprep.mubr.f32.mxu0 0.0
    %1276 = vmatmul.mubr.f32.gmra.mxu0 %v1066
    %v1277 = vpop.f32.mrf.mxu0
    %v1278 = vadd.f32 0.0, %v1277
    %v1279 = vpop.f32.mrf.mxu0
    %1280 = vmatprep.mubr.f32.mxu0 0.0
    %1281 = vmatmul.mubr.f32.gmra.mxu0 %v1069
    %v1282 = vpop.f32.mrf.mxu0
    %v1283 = vadd.f32 0.0, %v1282
    %v1284 = vpop.f32.mrf.mxu0
    %1285 = vmatprep.mubr.f32.mxu0 0.0
    %1286 = vmatmul.mubr.f32.gmra.mxu0 %v1072
    %v1287 = vpop.f32.mrf.mxu0
    %v1288 = vadd.f32 0.0, %v1287
    %v1289 = vpop.f32.mrf.mxu0
    %1290 = vmatprep.mubr.f32.mxu0 0.0
    %1291 = vmatmul.mubr.f32.gmra.mxu0 %v1075
    %v1292 = vpop.f32.mrf.mxu0
    %v1293 = vadd.f32 0.0, %v1292
    %v1294 = vpop.f32.mrf.mxu0
    %1295 = vmatprep.mubr.f32.mxu0 0.0
    %1296 = vmatmul.mubr.f32.gmra.mxu0 %v1078
    %v1297 = vpop.f32.mrf.mxu0
    %v1298 = vadd.f32 0.0, %v1297
    %v1299 = vpop.f32.mrf.mxu0
    %1300 = vmatprep.mubr.f32.mxu0 0.0
    %1301 = vmatmul.mubr.f32.gmra.mxu0 %v1081
    %v1302 = vpop.f32.mrf.mxu0
    %v1303 = vadd.f32 0.0, %v1302
    %v1304 = vpop.f32.mrf.mxu0
    %1305 = vmatprep.mubr.f32.mxu0 0.0
    %1306 = vmatmul.mubr.f32.gmra.mxu0 %v1084
    %v1307 = vpop.f32.mrf.mxu0
    %v1308 = vadd.f32 0.0, %v1307
    %v1309 = vpop.f32.mrf.mxu0
    %1310 = vdwg.mxu0
    %v1311 = vadd.f32 %v958, %v1153
    %v1312 = vadd.f32 %v959, %v1158
    %v1313 = vadd.f32 %v960, %v1163
    %v1314 = vadd.f32 %v961, %v1168
    %v1315 = vadd.f32 %v962, %v1173
    %v1316 = vadd.f32 %v963, %v1178
    %v1317 = vadd.f32 %v964, %v1183
    %v1318 = vadd.f32 %v965, %v1188
    %v1319 = vadd.f32 %v966, %v1193
    %v1320 = vadd.f32 %v967, %v1198
    %v1321 = vadd.f32 %v968, %v1203
    %v1322 = vadd.f32 %v969, %v1208
    %v1323 = vadd.f32 %v970, %v1213
    %v1324 = vadd.f32 %v971, %v1218
    %v1325 = vadd.f32 %v972, %v1223
    %v1326 = vadd.f32 %v973, %v1228
    %v1327 = vadd.f32 %v974, %v1233
    %v1328 = vadd.f32 %v975, %v1238
    %v1329 = vadd.f32 %v976, %v1243
    %v1330 = vadd.f32 %v977, %v1248
    %v1331 = vadd.f32 %v978, %v1253
    %v1332 = vadd.f32 %v979, %v1258
    %v1333 = vadd.f32 %v980, %v1263
    %v1334 = vadd.f32 %v981, %v1268
    %v1335 = vadd.f32 %v982, %v1273
    %v1336 = vadd.f32 %v983, %v1278
    %v1337 = vadd.f32 %v984, %v1283
    %v1338 = vadd.f32 %v985, %v1288
    %v1339 = vadd.f32 %v986, %v1293
    %v1340 = vadd.f32 %v987, %v1298
    %v1341 = vadd.f32 %v988, %v1303
    %v1342 = vadd.f32 %v989, %v1308
    %1343 = vst.msk [vmem:[#allocation3] sm:$0xff] %vm925, %v1311
    %1344 = vst.msk [vmem:[#allocation3 + $0x8] sm:$0xff] %vm925, %v1312
    %1345 = vst.msk [vmem:[#allocation3 + $0x10] sm:$0xff] %vm925, %v1313
    %1346 = vst.msk [vmem:[#allocation3 + $0x18] sm:$0xff] %vm925, %v1314
    %1347 = vst.msk [vmem:[#allocation3 + $0x20] sm:$0xff] %vm925, %v1315
    %1348 = vst.msk [vmem:[#allocation3 + $0x28] sm:$0xff] %vm925, %v1316
    %1349 = vst.msk [vmem:[#allocation3 + $0x30] sm:$0xff] %vm925, %v1317
    %1350 = vst.msk [vmem:[#allocation3 + $0x38] sm:$0xff] %vm925, %v1318
    %1351 = vst.msk [vmem:[#allocation3 + $0x40] sm:$0xff] %vm925, %v1319
    %1352 = vst.msk [vmem:[#allocation3 + $0x48] sm:$0xff] %vm925, %v1320
    %1353 = vst.msk [vmem:[#allocation3 + $0x50] sm:$0xff] %vm925, %v1321
    %1354 = vst.msk [vmem:[#allocation3 + $0x58] sm:$0xff] %vm925, %v1322
    %1355 = vst.msk [vmem:[#allocation3 + $0x60] sm:$0xff] %vm925, %v1323
    %1356 = vst.msk [vmem:[#allocation3 + $0x68] sm:$0xff] %vm925, %v1324
    %1357 = vst.msk [vmem:[#allocation3 + $0x70] sm:$0xff] %vm925, %v1325
    %1358 = vst.msk [vmem:[#allocation3 + $0x78] sm:$0xff] %vm925, %v1326
    %1359 = vst.msk [vmem:[#allocation3 + $0x80] sm:$0xff] %vm925, %v1327
    %1360 = vst.msk [vmem:[#allocation3 + $0x88] sm:$0xff] %vm925, %v1328
    %1361 = vst.msk [vmem:[#allocation3 + $0x90] sm:$0xff] %vm925, %v1329
    %1362 = vst.msk [vmem:[#allocation3 + $0x98] sm:$0xff] %vm925, %v1330
    %1363 = vst.msk [vmem:[#allocation3 + $0xa0] sm:$0xff] %vm925, %v1331
    %1364 = vst.msk [vmem:[#allocation3 + $0xa8] sm:$0xff] %vm925, %v1332
    %1365 = vst.msk [vmem:[#allocation3 + $0xb0] sm:$0xff] %vm925, %v1333
    %1366 = vst.msk [vmem:[#allocation3 + $0xb8] sm:$0xff] %vm925, %v1334
    %1367 = vst.msk [vmem:[#allocation3 + $0xc0] sm:$0xff] %vm925, %v1335
    %1368 = vst.msk [vmem:[#allocation3 + $0xc8] sm:$0xff] %vm925, %v1336
    %1369 = vst.msk [vmem:[#allocation3 + $0xd0] sm:$0xff] %vm925, %v1337
    %1370 = vst.msk [vmem:[#allocation3 + $0xd8] sm:$0xff] %vm925, %v1338
    %1371 = vst.msk [vmem:[#allocation3 + $0xe0] sm:$0xff] %vm925, %v1339
    %1372 = vst.msk [vmem:[#allocation3 + $0xe8] sm:$0xff] %vm925, %v1340
    %1373 = vst.msk [vmem:[#allocation3 + $0xf0] sm:$0xff] %vm925, %v1341
    %1374 = vst.msk [vmem:[#allocation3 + $0xf8] sm:$0xff] %vm925, %v1342
    // Predicated region
    $region18: #{tpu_custom_call.1} parent=1 // pred_check
      %p1375 = pneg %p15
    $region19: #{tpu_custom_call.1} parent=1 // pred_check_branch
      %1377 = sbr.rel (%p1375) target = $region21
    $region20: #{tpu_custom_call.1} parent=1 // pred_region
      %v1378 = vld [vmem:[#allocation2] sm:$0xff]
      %v1379 = vld [vmem:[#allocation2 + $0x8] sm:$0xff]
      %v1380 = vld [vmem:[#allocation2 + $0x10] sm:$0xff]
      %v1381 = vld [vmem:[#allocation2 + $0x18] sm:$0xff]
      %v1382 = vld [vmem:[#allocation2 + $0x20] sm:$0xff]
      %v1383 = vld [vmem:[#allocation2 + $0x28] sm:$0xff]
      %v1384 = vld [vmem:[#allocation2 + $0x30] sm:$0xff]
      %v1385 = vld [vmem:[#allocation2 + $0x38] sm:$0xff]
      %v1386 = vld [vmem:[#allocation2 + $0x40] sm:$0xff]
      %v1387 = vld [vmem:[#allocation2 + $0x48] sm:$0xff]
      %v1388 = vld [vmem:[#allocation2 + $0x50] sm:$0xff]
      %v1389 = vld [vmem:[#allocation2 + $0x58] sm:$0xff]
      %v1390 = vld [vmem:[#allocation2 + $0x60] sm:$0xff]
      %v1391 = vld [vmem:[#allocation2 + $0x68] sm:$0xff]
      %v1392 = vld [vmem:[#allocation2 + $0x70] sm:$0xff]
      %v1393 = vld [vmem:[#allocation2 + $0x78] sm:$0xff]
      %v1394 = vld [vmem:[#allocation2 + $0x80] sm:$0xff]
      %v1395 = vld [vmem:[#allocation2 + $0x88] sm:$0xff]
      %v1396 = vld [vmem:[#allocation2 + $0x90] sm:$0xff]
      %v1397 = vld [vmem:[#allocation2 + $0x98] sm:$0xff]
      %v1398 = vld [vmem:[#allocation2 + $0xa0] sm:$0xff]
      %v1399 = vld [vmem:[#allocation2 + $0xa8] sm:$0xff]
      %v1400 = vld [vmem:[#allocation2 + $0xb0] sm:$0xff]
      %v1401 = vld [vmem:[#allocation2 + $0xb8] sm:$0xff]
      %v1402 = vld [vmem:[#allocation2 + $0xc0] sm:$0xff]
      %v1403 = vld [vmem:[#allocation2 + $0xc8] sm:$0xff]
      %v1404 = vld [vmem:[#allocation2 + $0xd0] sm:$0xff]
      %v1405 = vld [vmem:[#allocation2 + $0xd8] sm:$0xff]
      %v1406 = vld [vmem:[#allocation2 + $0xe0] sm:$0xff]
      %v1407 = vld [vmem:[#allocation2 + $0xe8] sm:$0xff]
      %v1408 = vld [vmem:[#allocation2 + $0xf0] sm:$0xff]
      %v1409 = vld [vmem:[#allocation2 + $0xf8] sm:$0xff]
      %v1410 = vld [vmem:[#allocation3] sm:$0xff]
      %v1411 = vld [vmem:[#allocation3 + $0x8] sm:$0xff]
      %v1412 = vld [vmem:[#allocation3 + $0x10] sm:$0xff]
      %v1413 = vld [vmem:[#allocation3 + $0x18] sm:$0xff]
      %v1414 = vld [vmem:[#allocation3 + $0x20] sm:$0xff]
      %v1415 = vld [vmem:[#allocation3 + $0x28] sm:$0xff]
      %v1416 = vld [vmem:[#allocation3 + $0x30] sm:$0xff]
      %v1417 = vld [vmem:[#allocation3 + $0x38] sm:$0xff]
      %v1418 = vld [vmem:[#allocation3 + $0x40] sm:$0xff]
      %v1419 = vld [vmem:[#allocation3 + $0x48] sm:$0xff]
      %v1420 = vld [vmem:[#allocation3 + $0x50] sm:$0xff]
      %v1421 = vld [vmem:[#allocation3 + $0x58] sm:$0xff]
      %v1422 = vld [vmem:[#allocation3 + $0x60] sm:$0xff]
      %v1423 = vld [vmem:[#allocation3 + $0x68] sm:$0xff]
      %v1424 = vld [vmem:[#allocation3 + $0x70] sm:$0xff]
      %v1425 = vld [vmem:[#allocation3 + $0x78] sm:$0xff]
      %v1426 = vld [vmem:[#allocation3 + $0x80] sm:$0xff]
      %v1427 = vld [vmem:[#allocation3 + $0x88] sm:$0xff]
      %v1428 = vld [vmem:[#allocation3 + $0x90] sm:$0xff]
      %v1429 = vld [vmem:[#allocation3 + $0x98] sm:$0xff]
      %v1430 = vld [vmem:[#allocation3 + $0xa0] sm:$0xff]
      %v1431 = vld [vmem:[#allocation3 + $0xa8] sm:$0xff]
      %v1432 = vld [vmem:[#allocation3 + $0xb0] sm:$0xff]
      %v1433 = vld [vmem:[#allocation3 + $0xb8] sm:$0xff]
      %v1434 = vld [vmem:[#allocation3 + $0xc0] sm:$0xff]
      %v1435 = vld [vmem:[#allocation3 + $0xc8] sm:$0xff]
      %v1436 = vld [vmem:[#allocation3 + $0xd0] sm:$0xff]
      %v1437 = vld [vmem:[#allocation3 + $0xd8] sm:$0xff]
      %v1438 = vld [vmem:[#allocation3 + $0xe0] sm:$0xff]
      %v1439 = vld [vmem:[#allocation3 + $0xe8] sm:$0xff]
      %v1440 = vld [vmem:[#allocation3 + $0xf0] sm:$0xff]
      %v1441 = vld [vmem:[#allocation3 + $0xf8] sm:$0xff]
      %v1442 = vmul.f32 %v1378, %v1410
      %v1443 = vmul.f32 %v1379, %v1411
      %v1444 = vmul.f32 %v1380, %v1412
      %v1445 = vmul.f32 %v1381, %v1413
      %v1446 = vmul.f32 %v1382, %v1414
      %v1447 = vmul.f32 %v1383, %v1415
      %v1448 = vmul.f32 %v1384, %v1416
      %v1449 = vmul.f32 %v1385, %v1417
      %v1450 = vmul.f32 %v1386, %v1418
      %v1451 = vmul.f32 %v1387, %v1419
      %v1452 = vmul.f32 %v1388, %v1420
      %v1453 = vmul.f32 %v1389, %v1421
      %v1454 = vmul.f32 %v1390, %v1422
      %v1455 = vmul.f32 %v1391, %v1423
      %v1456 = vmul.f32 %v1392, %v1424
      %v1457 = vmul.f32 %v1393, %v1425
      %v1458 = vmul.f32 %v1394, %v1426
      %v1459 = vmul.f32 %v1395, %v1427
      %v1460 = vmul.f32 %v1396, %v1428
      %v1461 = vmul.f32 %v1397, %v1429
      %v1462 = vmul.f32 %v1398, %v1430
      %v1463 = vmul.f32 %v1399, %v1431
      %v1464 = vmul.f32 %v1400, %v1432
      %v1465 = vmul.f32 %v1401, %v1433
      %v1466 = vmul.f32 %v1402, %v1434
      %v1467 = vmul.f32 %v1403, %v1435
      %v1468 = vmul.f32 %v1404, %v1436
      %v1469 = vmul.f32 %v1405, %v1437
      %v1470 = vmul.f32 %v1406, %v1438
      %v1471 = vmul.f32 %v1407, %v1439
      %v1472 = vmul.f32 %v1408, %v1440
      %v1473 = vmul.f32 %v1409, %v1441
      %v1475 = vsel %vm925, 1.0, 0
      %v1478 = vsel %vm925, %v1442, 0
      %v1481 = vsel %vm925, %v1443, 0
      %v1484 = vsel %vm925, %v1444, 0
      %v1487 = vsel %vm925, %v1445, 0
      %v1490 = vsel %vm925, %v1446, 0
      %v1493 = vsel %vm925, %v1447, 0
      %v1496 = vsel %vm925, %v1448, 0
      %v1499 = vsel %vm925, %v1449, 0
      %v1502 = vsel %vm925, %v1450, 0
      %v1505 = vsel %vm925, %v1451, 0
      %v1508 = vsel %vm925, %v1452, 0
      %v1511 = vsel %vm925, %v1453, 0
      %v1514 = vsel %vm925, %v1454, 0
      %v1517 = vsel %vm925, %v1455, 0
      %v1520 = vsel %vm925, %v1456, 0
      %v1523 = vsel %vm925, %v1457, 0
      %v1526 = vsel %vm925, %v1458, 0
      %v1529 = vsel %vm925, %v1459, 0
      %v1532 = vsel %vm925, %v1460, 0
      %v1535 = vsel %vm925, %v1461, 0
      %v1538 = vsel %vm925, %v1462, 0
      %v1541 = vsel %vm925, %v1463, 0
      %v1544 = vsel %vm925, %v1464, 0
      %v1547 = vsel %vm925, %v1465, 0
      %v1550 = vsel %vm925, %v1466, 0
      %v1553 = vsel %vm925, %v1467, 0
      %v1556 = vsel %vm925, %v1468, 0
      %v1559 = vsel %vm925, %v1469, 0
      %v1562 = vsel %vm925, %v1470, 0
      %v1565 = vsel %vm925, %v1471, 0
      %v1568 = vsel %vm925, %v1472, 0
      %v1571 = vsel %vm925, %v1473, 0
      %1573 = vmatprep.subr.mxu0 0.0
      %1574 = vmatpush1.xpose.msra.mxu0 %v1523
      %1575 = vmatprep.subr.mxu0 0.0
      %1576 = vmatpush1.xpose.msra.mxu0 %v1520
      %1577 = vmatprep.subr.mxu0 0.0
      %1578 = vmatpush1.xpose.msra.mxu0 %v1517
      %1579 = vmatprep.subr.mxu0 0.0
      %1580 = vmatpush1.xpose.msra.mxu0 %v1514
      %1581 = vmatprep.subr.mxu0 0.0
      %1582 = vmatpush1.xpose.msra.mxu0 %v1511
      %1583 = vmatprep.subr.mxu0 0.0
      %1584 = vmatpush1.xpose.msra.mxu0 %v1508
      %1585 = vmatprep.subr.mxu0 0.0
      %1586 = vmatpush1.xpose.msra.mxu0 %v1505
      %1587 = vmatprep.subr.mxu0 0.0
      %1588 = vmatpush1.xpose.msra.mxu0 %v1502
      %1589 = vmatprep.subr.mxu0 0.0
      %1590 = vmatpush1.xpose.msra.mxu0 %v1499
      %1591 = vmatprep.subr.mxu0 0.0
      %1592 = vmatpush1.xpose.msra.mxu0 %v1496
      %1593 = vmatprep.subr.mxu0 0.0
      %1594 = vmatpush1.xpose.msra.mxu0 %v1493
      %1595 = vmatprep.subr.mxu0 0.0
      %1596 = vmatpush1.xpose.msra.mxu0 %v1490
      %1597 = vmatprep.subr.mxu0 0.0
      %1598 = vmatpush1.xpose.msra.mxu0 %v1487
      %1599 = vmatprep.subr.mxu0 0.0
      %1600 = vmatpush1.xpose.msra.mxu0 %v1484
      %1601 = vmatprep.subr.mxu0 0.0
      %1602 = vmatpush1.xpose.msra.mxu0 %v1481
      %1603 = vmatprep.subr.mxu0 0.0
      %1604 = vmatpush1.xpose.msra.mxu0 %v1478
      %1605 = vmatprep.subr.mxu0 0.0
      %1606 = vmatpush2.xpose.msra.mxu0 %v1571
      %1607 = vmatprep.subr.mxu0 0.0
      %1608 = vmatpush2.xpose.msra.mxu0 %v1568
      %1609 = vmatprep.subr.mxu0 0.0
      %1610 = vmatpush2.xpose.msra.mxu0 %v1565
      %1611 = vmatprep.subr.mxu0 0.0
      %1612 = vmatpush2.xpose.msra.mxu0 %v1562
      %1613 = vmatprep.subr.mxu0 0.0
      %1614 = vmatpush2.xpose.msra.mxu0 %v1559
      %1615 = vmatprep.subr.mxu0 0.0
      %1616 = vmatpush2.xpose.msra.mxu0 %v1556
      %1617 = vmatprep.subr.mxu0 0.0
      %1618 = vmatpush2.xpose.msra.mxu0 %v1553
      %1619 = vmatprep.subr.mxu0 0.0
      %1620 = vmatpush2.xpose.msra.mxu0 %v1550
      %1621 = vmatprep.subr.mxu0 0.0
      %1622 = vmatpush2.xpose.msra.mxu0 %v1547
      %1623 = vmatprep.subr.mxu0 0.0
      %1624 = vmatpush2.xpose.msra.mxu0 %v1544
      %1625 = vmatprep.subr.mxu0 0.0
      %1626 = vmatpush2.xpose.msra.mxu0 %v1541
      %1627 = vmatprep.subr.mxu0 0.0
      %1628 = vmatpush2.xpose.msra.mxu0 %v1538
      %1629 = vmatprep.subr.mxu0 0.0
      %1630 = vmatpush2.xpose.msra.mxu0 %v1535
      %1631 = vmatprep.subr.mxu0 0.0
      %1632 = vmatpush2.xpose.msra.mxu0 %v1532
      %1633 = vmatprep.subr.mxu0 0.0
      %1634 = vmatpush2.xpose.msra.mxu0 %v1529
      %1635 = vmatprep.subr.mxu0 0.0
      %1636 = vmatpush2.xpose.msra.mxu0 %v1526
      %1637 = vmatprep.mubr.f32.mxu0 0.0
      %1638 = vmatmul.mubr.f32.gmra.mxu0 %v1475
      %v1639 = vpop.f32.mrf.mxu0
      %v1640 = vadd.f32 0.0, %v1639
      %v1641 = vpop.f32.mrf.mxu0
      %v1642 = vadd.f32 0.0, %v1641
      %1643 = vdwg.mxu0
      %v1644 = vxor.u32 %v1640, 2147483648
      %v1645 = vxor.u32 %v1642, 2147483648
      %v1646 = vmul.f32 %v1644, 1.442695
      %v1647 = vpow.pop %v1646
      %v1648 = vmul.f32 %v1645, 1.442695
      %v1649 = vpow.pop %v1648
      %v1650 = vadd.f32 %v1647, 1.0
      %v1651 = vadd.f32 %v1649, 1.0
      %v1652 = vrcp.pop %v1650
      %v1653 = vmul.f32 1.0, %v1652
      %v1654 = vrcp.pop %v1651
      %v1655 = vmul.f32 1.0, %v1654
      %v1658 = vcombine.low %v1653, %v1655
      %v1660 = vunpack.c.l.s4 1966171168
      %v1661 = vunpack.c.0.s8 %v1660
      %v1662 = vlaneseq
      %v1663 = vshrl.u32 %v1662, 7
      %v1664 = vsub.s32 %v1661, %v1663
      %v1665 = vrot.slane %v1658, %v1664
      %v1667 = vunpack.c.l.s4 1966171168
      %v1668 = vunpack.c.0.s8 %v1667
      %v1669 = vlaneseq
      %v1670 = vshrl.u32 %v1669, 7
      %v1671 = vsub.s32 %v1668, %v1670
      %v1672 = vrot.slane %v1665, %v1671
      %v1674 = vlaneseq
      %vm1675 = vcmp.ge.s32.totalorder %v1674, 0
      %vm1676 = vcmp.lt.s32.totalorder %v1674, 256
      %vm1677 = vmand %vm1675, %vm1676
      %1678 = vst.msk [vmem:[#allocation4] sm:$0x3] %vm1677, %v1672
    $region21: #{tpu_custom_call.1} parent=1 // pred_fallthru
      _
    // Predicated region
    $region22: #{tpu_custom_call.1} parent=1 // pred_check
      _
    $region23: #{tpu_custom_call.1} parent=1 // pred_check_branch
      %1680 = sbr.rel (0) target = $region25
    $region24: #{tpu_custom_call.1} parent=1 // pred_region
      %s1682 = ssub.s32 32, 32
      %1683 = vsyncadd [#allocation5], %s1682
      %s1685 = sshll.u32 [#allocation4], 4
      %s1686 = int_to_ptr.vmem [resolvable:$true] %s1685
      %1688 = dma.vmem_to_hbm [thread:$0]  %s1686, 32, %s3, [#allocation5]
    $region25: #{tpu_custom_call.1} parent=1 // pred_fallthru
      _
    // Predicated region
    $region26: #{tpu_custom_call.1} parent=1 // pred_check
      _
    $region27: #{tpu_custom_call.1} parent=1 // pred_check_branch
      %1690 = sbr.rel (0) target = $region29
    $region28: #{tpu_custom_call.1} parent=1 // pred_region
      %1691 = dma.done [#allocation5], 32
    $region29: #{tpu_custom_call.1} parent=1 // pred_fallthru
      _
    %1692 = vsyncpa [#allocation5], 1

</llo_original>
